<compile_context>
chip_gen: v7x
topology: tpu7x:2x2x1
jax: 0.10.0
libtpu: 0.0.40
codegen_flags: <defaults>
</compile_context>

<pallas_src>
import numpy as np

import jax
import jax.numpy as jnp
from jax.experimental import pallas as pl
from jax.experimental.pallas import tpu as pltpu


# -----------------------------------------------------------------------------
# Pallas kernel: one grid step == Tb time steps of get_final_emb (all nodes).
# Layout: rows = feature index, lanes = (time-step, node) sample index.
# -----------------------------------------------------------------------------
def timenet_kernel(
    # inputs
    cwr_ref,   # (K, R)      cumulative-DFT real prefix, lane = (t_local*N + n)
    cwi_ref,   # (K, R)      cumulative-DFT imag prefix
    hx_ref,    # (K*Hd, R)   projected features tiled over (k, t_local), resident
    ekh_ref,   # (K*Hd, K)   expansion matrix E[k*Hd+h, k'] = (k == k')
    wfr_ref,   # (4Hd, K*Hd) fused layer-1 real weights  [W1_real ; W3_real]
    wfi_ref,   # (4Hd, K*Hd) fused layer-1 imag weights  [W1_imag ; W3_imag]
    b1_ref,    # (2Hd, 1)    node_spec_map layer-1 bias
    w2_ref,    # (K, 2Hd)    node_spec_map layer-2 weight (already / temperature)
    b2_ref,    # (K, 1)      node_spec_map layer-2 bias   (already / temperature)
    w3r_ref,   # (2Hd, K*Hd) spec_lin layer-1, real part
    w3i_ref,   # (2Hd, K*Hd) spec_lin layer-1, imag part
    b3_ref,    # (2Hd, 1)
    w4_ref,    # (Hd, 2Hd)   spec_lin layer-2
    b4_ref,    # (Hd, 1)
    # outputs
    cs_ref,    # (Hd, R)
    ss_ref,    # (Hd, R)
):
    Hd = cs_ref.shape[0]
    ekh = ekh_ref[...]
    hx = hx_ref[...]

    # Causal-prefix rfft(z, n=T, norm='ortho') spectra: expand the compact
    # cumulative-DFT rows over the Hd feature lanes (MXU) and scale by the
    # time-invariant projected features.
    sr = jnp.dot(ekh, cwr_ref[...], preferred_element_type=jnp.float32) * hx  # (K*Hd, R)
    si = jnp.dot(ekh, cwi_ref[...], preferred_element_type=jnp.float32) * hx  # (K*Hd, R)

    # --- fused layer-1: node_spec_map layer-1 rows [0:2Hd) and unmasked
    #     spec_lin layer-1 rows [2Hd:4Hd) in a single pair of matmuls ---------
    comb = (jnp.dot(wfr_ref[...], sr, preferred_element_type=jnp.float32)
            + jnp.dot(wfi_ref[...], si, preferred_element_type=jnp.float32))   # (4Hd, R)
    hid = jnp.maximum(comb[: 2 * Hd, :] + b1_ref[...], 0.0)                    # (2Hd, R)
    full = comb[2 * Hd:, :]                      # spec_lin pre-act, no mask

    # --- node_spec_map layer-2 + masks (temperature folded into w2/b2) -------
    nc = jnp.dot(w2_ref[...], hid, preferred_element_type=jnp.float32) + b2_ref[...]  # (K, R)
    cmask = jax.nn.sigmoid(nc)                   # smask = 1 - cmask
    mexp = jnp.dot(ekh, cmask, preferred_element_type=jnp.float32)             # (K*Hd, R)

    # --- spec_lin on the masked spectra: c-branch explicitly, s-branch as
    #     (full - c_pre) since smask = 1 - cmask --------------------------------
    c_pre = jnp.dot(w3r_ref[...], sr * mexp, preferred_element_type=jnp.float32)
    c_pre = c_pre + jnp.dot(w3i_ref[...], si * mexp, preferred_element_type=jnp.float32)
    s_pre = full - c_pre

    b3 = b3_ref[...]
    h2c = jnp.maximum(c_pre + b3, 0.0)
    h2s = jnp.maximum(s_pre + b3, 0.0)
    w4 = w4_ref[...]
    b4 = b4_ref[...]
    cs_ref[...] = jnp.dot(w4, h2c, preferred_element_type=jnp.float32) + b4    # (Hd, R)
    ss_ref[...] = jnp.dot(w4, h2s, preferred_element_type=jnp.float32) + b4


def _pick_num_time_blocks(T, N):
    """One grid step on single-TC chips (v5e/v6e); two parallel steps on v7x."""
    try:
        kind = jax.devices()[0].device_kind.lower()
    except Exception:
        kind = ""
    if ("v7" in kind or "tpu7" in kind) and T % 2 == 0 and ((T // 2) * N) % 128 == 0:
        return 2
    return 1


# -----------------------------------------------------------------------------
# Wrapper: parameter reshuffling / table precomputation (glue) + pallas_call
# -----------------------------------------------------------------------------
def timenet_forward(x, params, *, T, temperature, num_time_blocks=None):
    """x: [N, F] node features (replicated over time, as in the PyTorch module)."""
    N, F = x.shape
    Hd = params["Wlin"].shape[0]          # hid_dim = 2 * nhid
    K = 1 + T // 2                        # K_len = 1 + spec_len // 2
    f32 = jnp.float32

    if num_time_blocks is None:
        num_time_blocks = _pick_num_time_blocks(T, N)
    # graceful fallback: multi-step grids need 128-aligned lane blocks
    if num_time_blocks > 1 and (
            T % num_time_blocks != 0 or ((T // num_time_blocks) * N) % 128 != 0):
        num_time_blocks = 1
    Tb = T // num_time_blocks
    R = Tb * N

    # --- glue: deterministic reshuffling of the PyTorch-shaped weights ---------
    W1 = params["W1"].reshape(2 * Hd, K, Hd, 2)           # input order (k, h, re/im)
    W1r = W1[..., 0].reshape(2 * Hd, K * Hd)
    W1i = W1[..., 1].reshape(2 * Hd, K * Hd)
    W3 = params["W3"].reshape(2 * Hd, K, 2, Hd)            # input order (k, re/im, h)
    W3r = W3[:, :, 0, :].reshape(2 * Hd, K * Hd)
    W3i = W3[:, :, 1, :].reshape(2 * Hd, K * Hd)
    Wfr = jnp.concatenate([W1r, W3r], axis=0)              # (4Hd, K*Hd)
    Wfi = jnp.concatenate([W1i, W3i], axis=0)
    W2t = params["W2"] / temperature                        # (K, 2Hd)
    b2t = (params["b2"] / temperature).reshape(K, 1)
    b1c = params["b1"].reshape(2 * Hd, 1)
    b3c = params["b3"].reshape(2 * Hd, 1)
    W4m = params["W4"]                                      # (Hd, 2Hd)
    b4c = params["b4"].reshape(Hd, 1)

    # linear projection (no bias); constant over time so computed once here
    h = x.astype(f32) @ params["Wlin"].T.astype(f32)        # (N, Hd)

    # cumulative DFT tables for rfft over the zero-padded causal prefix, in
    # float64 on host to avoid f32 cumsum drift for long sequences:
    #   cumWr[t, k] = sum_{s<=t} cos(2*pi*k*s/T)/sqrt(T),  cumWi = -sum sin(...)/sqrt(T)
    tt = np.arange(T, dtype=np.float64)[:, None]
    kk = np.arange(K, dtype=np.float64)[None, :]
    ang = 2.0 * np.pi * tt * kk / T
    scale = 1.0 / np.sqrt(float(T))
    cumWr = np.cumsum(np.cos(ang) * scale, axis=0)          # (T, K)
    cumWi = np.cumsum(-np.sin(ang) * scale, axis=0)         # (T, K)
    # compact stream: lane = (t, n) sample index, node-replicated only N-fold
    cwr_lane = jnp.asarray(np.repeat(cumWr.T, N, axis=1), f32)   # (K, T*N)
    cwi_lane = jnp.asarray(np.repeat(cumWi.T, N, axis=1), f32)   # (K, T*N)

    # resident projected-feature slab: hx[k*Hd + hd, t*N + n] = h[n, hd]
    hx = jnp.tile(jnp.tile(h.T, (K, 1)), (1, Tb)).astype(f32)    # (K*Hd, R)

    # expansion matrix over the Hd lanes of each spectral bin
    Ekh = jnp.repeat(jnp.eye(K, dtype=f32), Hd, axis=0)          # (K*Hd, K)

    const = lambda i: (0, 0)
    stream = lambda i: (0, i)
    grid_spec = pltpu.PrefetchScalarGridSpec(
        num_scalar_prefetch=0,
        grid=(num_time_blocks,),
        in_specs=[
            pl.BlockSpec((K, R), stream),                # cwr_lane  (streamed)
            pl.BlockSpec((K, R), stream),                # cwi_lane  (streamed)
            pl.BlockSpec((K * Hd, R), const),            # hx        (resident)
            pl.BlockSpec((K * Hd, K), const),            # Ekh
            pl.BlockSpec((4 * Hd, K * Hd), const),       # Wfr
            pl.BlockSpec((4 * Hd, K * Hd), const),       # Wfi
            pl.BlockSpec((2 * Hd, 1), const),            # b1
            pl.BlockSpec((K, 2 * Hd), const),            # W2 / temperature
            pl.BlockSpec((K, 1), const),                 # b2 / temperature
            pl.BlockSpec((2 * Hd, K * Hd), const),       # W3r
            pl.BlockSpec((2 * Hd, K * Hd), const),       # W3i
            pl.BlockSpec((2 * Hd, 1), const),            # b3
            pl.BlockSpec((Hd, 2 * Hd), const),           # W4
            pl.BlockSpec((Hd, 1), const),                # b4
        ],
        out_specs=[
            pl.BlockSpec((Hd, R), stream),               # cs columns (lane-dense)
            pl.BlockSpec((Hd, R), stream),               # ss columns (lane-dense)
        ],
    )

    cs_cols, ss_cols = pl.pallas_call(
        timenet_kernel,
        out_shape=(
            jax.ShapeDtypeStruct((Hd, T * N), f32),
            jax.ShapeDtypeStruct((Hd, T * N), f32),
        ),
        grid_spec=grid_spec,
        compiler_params=pltpu.CompilerParams(
            dimension_semantics=("parallel",)),   # no carried state -> megacore OK
    )(cwr_lane, cwi_lane, hx, Ekh,
      Wfr.astype(f32), Wfi.astype(f32), b1c.astype(f32),
      W2t.astype(f32), b2t.astype(f32),
      W3r.astype(f32), W3i.astype(f32), b3c.astype(f32),
      W4m.astype(f32), b4c.astype(f32))

    # layout plumbing back to (T, N, Hd) -- free wrapper-side reshape/transpose
    cs = cs_cols.reshape(Hd, T, N).transpose(1, 2, 0)
    ss = ss_cols.reshape(Hd, T, N).transpose(1, 2, 0)
    return cs, ss


# -----------------------------------------------------------------------------
# Pure-JAX reference (mirrors the PyTorch forward exactly) for validation
# -----------------------------------------------------------------------------
def timenet_reference(x, P, *, T, temperature):
    N, F = x.shape
    Hd = P["Wlin"].shape[0]
    K = 1 + T // 2
    h = x @ P["Wlin"].T                                  # linear, no bias
    cs_list, ss_list = [], []
    for t in range(T):
        z = jnp.broadcast_to(h, (t + 1, N, Hd))          # stacked x_list
        z = jnp.transpose(z, (1, 0, 2))                  # (N, t+1, Hd)
        specs = jnp.fft.rfft(z, n=T, axis=1, norm="ortho")  # (N, K, Hd) complex
        sr, si = jnp.real(specs), jnp.imag(specs)
        v1 = jnp.stack([sr, si], axis=-1).reshape(N, K * Hd * 2)
        hid = jax.nn.relu(v1 @ P["W1"].T + P["b1"])
        nc = hid @ P["W2"].T + P["b2"]
        cm = jax.nn.sigmoid(nc / temperature)
        sm = jax.nn.sigmoid(-nc / temperature)

        def spec_lin(mask):
            cr = sr * mask[:, :, None]
            ci = si * mask[:, :, None]
            v = jnp.concatenate([cr, ci], axis=-1).reshape(N, K * 2 * Hd)
            hh = jax.nn.relu(v @ P["W3"].T + P["b3"])
            return hh @ P["W4"].T + P["b4"]

        cs_list.append(spec_lin(cm))
        ss_list.append(spec_lin(sm))
    return jnp.stack(cs_list), jnp.stack(ss_list)


# -----------------------------------------------------------------------------
# Main
# -----------------------------------------------------------------------------
if __name__ == "__main__":
    # small, module-consistent shapes: nfeat=4, nhid=8 -> hid_dim=16, T=16, N=16
    F = 4            # args.nfeat
    nhid = 8
    Hd = 2 * nhid    # hid_dim
    T = 16           # args.length (time_length == spec_len)
    K = 1 + T // 2   # K_len
    N = 16           # number of graph nodes
    temperature = 0.5

    key = jax.random.PRNGKey(0)
    ks = jax.random.split(key, 10)
    params = {
        "Wlin": jax.random.normal(ks[0], (Hd, F), jnp.float32) * 0.3,
        "W1":   jax.random.normal(ks[1], (2 * Hd, K * Hd * 2), jnp.float32) * 0.1,
        "b1":   jax.random.normal(ks[2], (2 * Hd,), jnp.float32) * 0.1,
        "W2":   jax.random.normal(ks[3], (K, 2 * Hd), jnp.float32) * 0.1,
        "b2":   jax.random.normal(ks[4], (K,), jnp.float32) * 0.1,
        "W3":   jax.random.normal(ks[5], (2 * Hd, K * 2 * Hd), jnp.float32) * 0.1,
        "b3":   jax.random.normal(ks[6], (2 * Hd,), jnp.float32) * 0.1,
        "W4":   jax.random.normal(ks[7], (Hd, 2 * Hd), jnp.float32) * 0.1,
        "b4":   jax.random.normal(ks[8], (Hd,), jnp.float32) * 0.1,
    }
    x = jax.random.normal(ks[9], (N, F), jnp.float32)

    cs, ss = timenet_forward(x, params, T=T, temperature=temperature)
    cs = jax.block_until_ready(cs)
    ss = jax.block_until_ready(ss)

    cs_ref, ss_ref = timenet_reference(x, params, T=T, temperature=temperature)
    assert cs.shape == (T, N, Hd) and ss.shape == (T, N, Hd)
    assert jnp.allclose(cs, cs_ref, atol=2e-3, rtol=2e-3), "cs mismatch vs reference"
    assert jnp.allclose(ss, ss_ref, atol=2e-3, rtol=2e-3), "ss mismatch vs reference"

    # TODO(synk): COLLECTOR cache logging and the optional post_gnn nodeconv /
    # use_filt=False branches are host-side / config side-paths and are omitted.
    print("KERNEL_OK")
</pallas_src>

<mosaic_0001>
module attributes {stable_mosaic.version = 11 : i64} {
  func.func @timenet_kernel(%arg0: i32, %arg1: memref<9x256xf32, #tpu.memory_space<vmem>>, %arg2: memref<9x256xf32, #tpu.memory_space<vmem>>, %arg3: memref<144x256xf32, #tpu.memory_space<vmem>>, %arg4: memref<144x9xf32, #tpu.memory_space<vmem>>, %arg5: memref<64x144xf32, #tpu.memory_space<vmem>>, %arg6: memref<64x144xf32, #tpu.memory_space<vmem>>, %arg7: memref<32x1xf32, #tpu.memory_space<vmem>>, %arg8: memref<9x32xf32, #tpu.memory_space<vmem>>, %arg9: memref<9x1xf32, #tpu.memory_space<vmem>>, %arg10: memref<32x144xf32, #tpu.memory_space<vmem>>, %arg11: memref<32x144xf32, #tpu.memory_space<vmem>>, %arg12: memref<32x1xf32, #tpu.memory_space<vmem>>, %arg13: memref<16x32xf32, #tpu.memory_space<vmem>>, %arg14: memref<16x1xf32, #tpu.memory_space<vmem>>, %arg15: memref<16x256xf32, #tpu.memory_space<vmem>>, %arg16: memref<16x256xf32, #tpu.memory_space<vmem>>) attributes {dimension_semantics = [#tpu.dimension_semantics<parallel>], iteration_bounds = array<i64: 1>, scalar_prefetch = 0 : i64, scratch_operands = 0 : i64, tpu.core_type = #tpu.core_type<tc>, window_params = [{transform_indices = @transform_0, window_bounds = array<i64: 9, 256>}, {transform_indices = @transform_1, window_bounds = array<i64: 9, 256>}, {pipeline_mode = #tpu.pipeline_mode<synchronous>, transform_indices = @transform_2, window_bounds = array<i64: 144, 256>}, {pipeline_mode = #tpu.pipeline_mode<synchronous>, transform_indices = @transform_3, window_bounds = array<i64: 144, 9>}, {pipeline_mode = #tpu.pipeline_mode<synchronous>, transform_indices = @transform_4, window_bounds = array<i64: 64, 144>}, {pipeline_mode = #tpu.pipeline_mode<synchronous>, transform_indices = @transform_5, window_bounds = array<i64: 64, 144>}, {pipeline_mode = #tpu.pipeline_mode<synchronous>, transform_indices = @transform_6, window_bounds = array<i64: 32, 1>}, {pipeline_mode = #tpu.pipeline_mode<synchronous>, transform_indices = @transform_7, window_bounds = array<i64: 9, 32>}, {pipeline_mode = #tpu.pipeline_mode<synchronous>, transform_indices = @transform_8, window_bounds = array<i64: 9, 1>}, {pipeline_mode = #tpu.pipeline_mode<synchronous>, transform_indices = @transform_9, window_bounds = array<i64: 32, 144>}, {pipeline_mode = #tpu.pipeline_mode<synchronous>, transform_indices = @transform_10, window_bounds = array<i64: 32, 144>}, {pipeline_mode = #tpu.pipeline_mode<synchronous>, transform_indices = @transform_11, window_bounds = array<i64: 32, 1>}, {pipeline_mode = #tpu.pipeline_mode<synchronous>, transform_indices = @transform_12, window_bounds = array<i64: 16, 32>}, {pipeline_mode = #tpu.pipeline_mode<synchronous>, transform_indices = @transform_13, window_bounds = array<i64: 16, 1>}, {transform_indices = @transform_14, window_bounds = array<i64: 16, 256>}, {transform_indices = @transform_15, window_bounds = array<i64: 16, 256>}]} {
    %c0 = arith.constant 0 : index
    %c0_0 = arith.constant 0 : index
    %0 = vector.load %arg4[%c0, %c0_0] : memref<144x9xf32, #tpu.memory_space<vmem>>, vector<144x9xf32>
    %c0_1 = arith.constant 0 : index
    %c0_2 = arith.constant 0 : index
    %1 = vector.load %arg3[%c0_1, %c0_2] : memref<144x256xf32, #tpu.memory_space<vmem>>, vector<144x256xf32>
    %c0_3 = arith.constant 0 : index
    %c0_4 = arith.constant 0 : index
    %2 = vector.load %arg1[%c0_3, %c0_4] : memref<9x256xf32, #tpu.memory_space<vmem>>, vector<9x256xf32>
    %cst = arith.constant dense<0.000000e+00> : vector<144x256xf32>
    %3 = tpu.matmul %0, %2, %cst {dimension_numbers = #tpu.dot_dimension_numbers<[1], [0], [0], [1], [0, 0, 1, 1], [], []>} : vector<144x9xf32>, vector<9x256xf32>, vector<144x256xf32> -> vector<144x256xf32>
    %4 = arith.mulf %3, %1 : vector<144x256xf32>
    %c0_5 = arith.constant 0 : index
    %c0_6 = arith.constant 0 : index
    %5 = vector.load %arg2[%c0_5, %c0_6] : memref<9x256xf32, #tpu.memory_space<vmem>>, vector<9x256xf32>
    %cst_7 = arith.constant dense<0.000000e+00> : vector<144x256xf32>
    %6 = tpu.matmul %0, %5, %cst_7 {dimension_numbers = #tpu.dot_dimension_numbers<[1], [0], [0], [1], [0, 0, 1, 1], [], []>} : vector<144x9xf32>, vector<9x256xf32>, vector<144x256xf32> -> vector<144x256xf32>
    %7 = arith.mulf %6, %1 : vector<144x256xf32>
    %c0_8 = arith.constant 0 : index
    %c0_9 = arith.constant 0 : index
    %8 = vector.load %arg5[%c0_8, %c0_9] : memref<64x144xf32, #tpu.memory_space<vmem>>, vector<64x144xf32>
    %cst_10 = arith.constant dense<0.000000e+00> : vector<64x256xf32>
    %9 = tpu.matmul %8, %4, %cst_10 {dimension_numbers = #tpu.dot_dimension_numbers<[1], [0], [0], [1], [0, 0, 1, 1], [], []>} : vector<64x144xf32>, vector<144x256xf32>, vector<64x256xf32> -> vector<64x256xf32>
    %c0_11 = arith.constant 0 : index
    %c0_12 = arith.constant 0 : index
    %10 = vector.load %arg6[%c0_11, %c0_12] : memref<64x144xf32, #tpu.memory_space<vmem>>, vector<64x144xf32>
    %cst_13 = arith.constant dense<0.000000e+00> : vector<64x256xf32>
    %11 = tpu.matmul %10, %7, %cst_13 {dimension_numbers = #tpu.dot_dimension_numbers<[1], [0], [0], [1], [0, 0, 1, 1], [], []>} : vector<64x144xf32>, vector<144x256xf32>, vector<64x256xf32> -> vector<64x256xf32>
    %12 = arith.addf %9, %11 : vector<64x256xf32>
    %13 = vector.extract_strided_slice %12 {offsets = [0, 0], sizes = [32, 256], strides = [1, 1]} : vector<64x256xf32> to vector<32x256xf32>
    %c0_14 = arith.constant 0 : index
    %c0_15 = arith.constant 0 : index
    %14 = vector.load %arg7[%c0_14, %c0_15] : memref<32x1xf32, #tpu.memory_space<vmem>>, vector<32x1xf32>
    %15 = vector.broadcast %14 : vector<32x1xf32> to vector<32x256xf32>
    %16 = arith.addf %13, %15 : vector<32x256xf32>
    %cst_16 = arith.constant 0.000000e+00 : f32
    %17 = vector.broadcast %cst_16 : f32 to vector<32x256xf32>
    %18 = arith.maximumf %16, %17 : vector<32x256xf32>
    %19 = vector.extract_strided_slice %12 {offsets = [32, 0], sizes = [32, 256], strides = [1, 1]} : vector<64x256xf32> to vector<32x256xf32>
    %c0_17 = arith.constant 0 : index
    %c0_18 = arith.constant 0 : index
    %20 = vector.load %arg8[%c0_17, %c0_18] : memref<9x32xf32, #tpu.memory_space<vmem>>, vector<9x32xf32>
    %cst_19 = arith.constant dense<0.000000e+00> : vector<9x256xf32>
    %21 = tpu.matmul %20, %18, %cst_19 {dimension_numbers = #tpu.dot_dimension_numbers<[1], [0], [0], [1], [0, 0, 1, 1], [], []>} : vector<9x32xf32>, vector<32x256xf32>, vector<9x256xf32> -> vector<9x256xf32>
    %c0_20 = arith.constant 0 : index
    %c0_21 = arith.constant 0 : index
    %22 = vector.load %arg9[%c0_20, %c0_21] : memref<9x1xf32, #tpu.memory_space<vmem>>, vector<9x1xf32>
    %23 = vector.broadcast %22 : vector<9x1xf32> to vector<9x256xf32>
    %24 = arith.addf %21, %23 : vector<9x256xf32>
    %25 = arith.negf %24 : vector<9x256xf32>
    %26 = math.exp %25 : vector<9x256xf32>
    %cst_22 = arith.constant 1.000000e+00 : f32
    %27 = vector.broadcast %cst_22 : f32 to vector<9x256xf32>
    %28 = arith.addf %27, %26 : vector<9x256xf32>
    %29 = arith.divf %27, %28 : vector<9x256xf32>
    %cst_23 = arith.constant dense<0.000000e+00> : vector<144x256xf32>
    %30 = tpu.matmul %0, %29, %cst_23 {dimension_numbers = #tpu.dot_dimension_numbers<[1], [0], [0], [1], [0, 0, 1, 1], [], []>} : vector<144x9xf32>, vector<9x256xf32>, vector<144x256xf32> -> vector<144x256xf32>
    %c0_24 = arith.constant 0 : index
    %c0_25 = arith.constant 0 : index
    %31 = vector.load %arg10[%c0_24, %c0_25] : memref<32x144xf32, #tpu.memory_space<vmem>>, vector<32x144xf32>
    %32 = arith.mulf %4, %30 : vector<144x256xf32>
    %cst_26 = arith.constant dense<0.000000e+00> : vector<32x256xf32>
    %33 = tpu.matmul %31, %32, %cst_26 {dimension_numbers = #tpu.dot_dimension_numbers<[1], [0], [0], [1], [0, 0, 1, 1], [], []>} : vector<32x144xf32>, vector<144x256xf32>, vector<32x256xf32> -> vector<32x256xf32>
    %c0_27 = arith.constant 0 : index
    %c0_28 = arith.constant 0 : index
    %34 = vector.load %arg11[%c0_27, %c0_28] : memref<32x144xf32, #tpu.memory_space<vmem>>, vector<32x144xf32>
    %35 = arith.mulf %7, %30 : vector<144x256xf32>
    %cst_29 = arith.constant dense<0.000000e+00> : vector<32x256xf32>
    %36 = tpu.matmul %34, %35, %cst_29 {dimension_numbers = #tpu.dot_dimension_numbers<[1], [0], [0], [1], [0, 0, 1, 1], [], []>} : vector<32x144xf32>, vector<144x256xf32>, vector<32x256xf32> -> vector<32x256xf32>
    %37 = arith.addf %33, %36 : vector<32x256xf32>
    %38 = arith.subf %19, %37 : vector<32x256xf32>
    %c0_30 = arith.constant 0 : index
    %c0_31 = arith.constant 0 : index
    %39 = vector.load %arg12[%c0_30, %c0_31] : memref<32x1xf32, #tpu.memory_space<vmem>>, vector<32x1xf32>
    %40 = vector.broadcast %39 : vector<32x1xf32> to vector<32x256xf32>
    %41 = arith.addf %37, %40 : vector<32x256xf32>
    %cst_32 = arith.constant 0.000000e+00 : f32
    %42 = vector.broadcast %cst_32 : f32 to vector<32x256xf32>
    %43 = arith.maximumf %41, %42 : vector<32x256xf32>
    %44 = vector.broadcast %39 : vector<32x1xf32> to vector<32x256xf32>
    %45 = arith.addf %38, %44 : vector<32x256xf32>
    %cst_33 = arith.constant 0.000000e+00 : f32
    %46 = vector.broadcast %cst_33 : f32 to vector<32x256xf32>
    %47 = arith.maximumf %45, %46 : vector<32x256xf32>
    %c0_34 = arith.constant 0 : index
    %c0_35 = arith.constant 0 : index
    %48 = vector.load %arg13[%c0_34, %c0_35] : memref<16x32xf32, #tpu.memory_space<vmem>>, vector<16x32xf32>
    %c0_36 = arith.constant 0 : index
    %c0_37 = arith.constant 0 : index
    %49 = vector.load %arg14[%c0_36, %c0_37] : memref<16x1xf32, #tpu.memory_space<vmem>>, vector<16x1xf32>
    %cst_38 = arith.constant dense<0.000000e+00> : vector<16x256xf32>
    %50 = tpu.matmul %48, %43, %cst_38 {dimension_numbers = #tpu.dot_dimension_numbers<[1], [0], [0], [1], [0, 0, 1, 1], [], []>} : vector<16x32xf32>, vector<32x256xf32>, vector<16x256xf32> -> vector<16x256xf32>
    %51 = vector.broadcast %49 : vector<16x1xf32> to vector<16x256xf32>
    %52 = arith.addf %50, %51 : vector<16x256xf32>
    %c0_39 = arith.constant 0 : index
    %c0_40 = arith.constant 0 : index
    %53 = vector.load %arg15[%c0_39, %c0_40] : memref<16x256xf32, #tpu.memory_space<vmem>>, vector<16x256xf32>
    tpu.vector_store %arg15[%c0_39, %c0_40], %52 {strides = array<i32>} : memref<16x256xf32, #tpu.memory_space<vmem>>, vector<16x256xf32>,
    %cst_41 = arith.constant dense<0.000000e+00> : vector<16x256xf32>
    %54 = tpu.matmul %48, %47, %cst_41 {dimension_numbers = #tpu.dot_dimension_numbers<[1], [0], [0], [1], [0, 0, 1, 1], [], []>} : vector<16x32xf32>, vector<32x256xf32>, vector<16x256xf32> -> vector<16x256xf32>
    %55 = vector.broadcast %49 : vector<16x1xf32> to vector<16x256xf32>
    %56 = arith.addf %54, %55 : vector<16x256xf32>
    %c0_42 = arith.constant 0 : index
    %c0_43 = arith.constant 0 : index
    %57 = vector.load %arg16[%c0_42, %c0_43] : memref<16x256xf32, #tpu.memory_space<vmem>>, vector<16x256xf32>
    tpu.vector_store %arg16[%c0_42, %c0_43], %56 {strides = array<i32>} : memref<16x256xf32, #tpu.memory_space<vmem>>, vector<16x256xf32>,
    return
  }
  func.func @transform_0(%arg0: i32) -> (i32, i32) {
    %c0_i32 = arith.constant 0 : i32
    %c0_i32_0 = arith.constant 0 : i32
    return %c0_i32, %arg0 : i32, i32
  }
  func.func @transform_1(%arg0: i32) -> (i32, i32) {
    %c0_i32 = arith.constant 0 : i32
    %c0_i32_0 = arith.constant 0 : i32
    return %c0_i32, %arg0 : i32, i32
  }
  func.func @transform_2(%arg0: i32) -> (i32, i32) {
    %c0_i32 = arith.constant 0 : i32
    %c0_i32_0 = arith.constant 0 : i32
    %c0_i32_1 = arith.constant 0 : i32
    return %c0_i32, %c0_i32_0 : i32, i32
  }
  func.func @transform_3(%arg0: i32) -> (i32, i32) {
    %c0_i32 = arith.constant 0 : i32
    %c0_i32_0 = arith.constant 0 : i32
    %c0_i32_1 = arith.constant 0 : i32
    return %c0_i32, %c0_i32_0 : i32, i32
  }
  func.func @transform_4(%arg0: i32) -> (i32, i32) {
    %c0_i32 = arith.constant 0 : i32
    %c0_i32_0 = arith.constant 0 : i32
    %c0_i32_1 = arith.constant 0 : i32
    return %c0_i32, %c0_i32_0 : i32, i32
  }
  func.func @transform_5(%arg0: i32) -> (i32, i32) {
    %c0_i32 = arith.constant 0 : i32
    %c0_i32_0 = arith.constant 0 : i32
    %c0_i32_1 = arith.constant 0 : i32
    return %c0_i32, %c0_i32_0 : i32, i32
  }
  func.func @transform_6(%arg0: i32) -> (i32, i32) {
    %c0_i32 = arith.constant 0 : i32
    %c0_i32_0 = arith.constant 0 : i32
    %c0_i32_1 = arith.constant 0 : i32
    return %c0_i32, %c0_i32_0 : i32, i32
  }
  func.func @transform_7(%arg0: i32) -> (i32, i32) {
    %c0_i32 = arith.constant 0 : i32
    %c0_i32_0 = arith.constant 0 : i32
    %c0_i32_1 = arith.constant 0 : i32
    return %c0_i32, %c0_i32_0 : i32, i32
  }
  func.func @transform_8(%arg0: i32) -> (i32, i32) {
    %c0_i32 = arith.constant 0 : i32
    %c0_i32_0 = arith.constant 0 : i32
    %c0_i32_1 = arith.constant 0 : i32
    return %c0_i32, %c0_i32_0 : i32, i32
  }
  func.func @transform_9(%arg0: i32) -> (i32, i32) {
    %c0_i32 = arith.constant 0 : i32
    %c0_i32_0 = arith.constant 0 : i32
    %c0_i32_1 = arith.constant 0 : i32
    return %c0_i32, %c0_i32_0 : i32, i32
  }
  func.func @transform_10(%arg0: i32) -> (i32, i32) {
    %c0_i32 = arith.constant 0 : i32
    %c0_i32_0 = arith.constant 0 : i32
    %c0_i32_1 = arith.constant 0 : i32
    return %c0_i32, %c0_i32_0 : i32, i32
  }
  func.func @transform_11(%arg0: i32) -> (i32, i32) {
    %c0_i32 = arith.constant 0 : i32
    %c0_i32_0 = arith.constant 0 : i32
    %c0_i32_1 = arith.constant 0 : i32
    return %c0_i32, %c0_i32_0 : i32, i32
  }
  func.func @transform_12(%arg0: i32) -> (i32, i32) {
    %c0_i32 = arith.constant 0 : i32
    %c0_i32_0 = arith.constant 0 : i32
    %c0_i32_1 = arith.constant 0 : i32
    return %c0_i32, %c0_i32_0 : i32, i32
  }
  func.func @transform_13(%arg0: i32) -> (i32, i32) {
    %c0_i32 = arith.constant 0 : i32
    %c0_i32_0 = arith.constant 0 : i32
    %c0_i32_1 = arith.constant 0 : i32
    return %c0_i32, %c0_i32_0 : i32, i32
  }
  func.func @transform_14(%arg0: i32) -> (i32, i32) {
    %c0_i32 = arith.constant 0 : i32
    %c0_i32_0 = arith.constant 0 : i32
    return %c0_i32, %arg0 : i32, i32
  }
  func.func @transform_15(%arg0: i32) -> (i32, i32) {
    %c0_i32 = arith.constant 0 : i32
    %c0_i32_0 = arith.constant 0 : i32
    return %c0_i32, %arg0 : i32, i32
  }
}

</mosaic_0001>

<llo_original>
// kernel: tpu_custom_call.1
$region0: #{tpu_custom_call.1}
  #allocation0 [shape = 'u32[]', space=smem, size = 0x4, offset = 0x4, fixed_abs, tag = 'smem constant byte address 0x4 - core index']
  #allocation1 [shape = 'u32[144,128]{1,0:T(1,128)}', space=vmem, size = 0x12000, scoped, tag = 'internal scratch']
  %s0 = inlined_call_operand.hbm [shape: f32[9,256], index: 0, kind: input, shape index: {}]
  %s1 = inlined_call_operand.hbm [shape: f32[9,256], index: 1, kind: input, shape index: {}]
  %s2 = inlined_call_operand.hbm [shape: f32[144,256], index: 2, kind: input, shape index: {}]
  %s3 = inlined_call_operand.vmem [shape: f32[144,9], index: 3, kind: input, shape index: {}]
  %s4 = inlined_call_operand.vmem [shape: f32[64,144], index: 4, kind: input, shape index: {}]
  %s5 = inlined_call_operand.vmem [shape: f32[64,144], index: 5, kind: input, shape index: {}]
  %s6 = inlined_call_operand.vmem [shape: f32[32,1], index: 6, kind: input, shape index: {}]
  %s7 = inlined_call_operand.vmem [shape: f32[9,32], index: 7, kind: input, shape index: {}]
  %s8 = inlined_call_operand.vmem [shape: f32[9,1], index: 8, kind: input, shape index: {}]
  %s9 = inlined_call_operand.hbm [shape: f32[32,144], index: 9, kind: input, shape index: {}]
  %s10 = inlined_call_operand.hbm [shape: f32[32,144], index: 10, kind: input, shape index: {}]
  %s11 = inlined_call_operand.vmem [shape: f32[32,1], index: 11, kind: input, shape index: {}]
  %s12 = inlined_call_operand.vmem [shape: f32[16,32], index: 12, kind: input, shape index: {}]
  %s13 = inlined_call_operand.vmem [shape: f32[16,1], index: 13, kind: input, shape index: {}]
  %s14 = inlined_call_operand.hbm [shape: f32[16,256], index: 14, kind: output, shape index: {0}]
  %s15 = inlined_call_operand.hbm [shape: f32[16,256], index: 15, kind: output, shape index: {1}]
  %16 = xla_tuple %s14, %s15
  %s17 = sld [smem:[#allocation0]]
  $region94: #{tpu_custom_call.1} parent=0
    _
  %s19 = ssub.s32 1, %s17
  %s20 = scalar_select 0, %s19, %s17
  $region1: #{tpu_custom_call.1} parent=0
    #allocation2 [shape = 'u8[16384]{0}', space=vmem, size = 0x4000, scoped, tag = 'input window, operand 0, single buffered']
    #allocation3 [shape = 's32[1]{0}', space=sflag, size = 0x4, scoped, tag = 'scoped memory for tpu_custom_call.1']
    #allocation4 [shape = 's32[1]{0}', space=sflag, size = 0x4, scoped, tag = 'scoped memory for tpu_custom_call.1']
    #allocation5 [shape = 'u8[16384]{0}', space=vmem, size = 0x4000, scoped, tag = 'input window, operand 1, single buffered']
    #allocation6 [shape = 's32[1]{0}', space=sflag, size = 0x4, scoped, tag = 'scoped memory for tpu_custom_call.1']
    #allocation7 [shape = 'u8[147456]{0}', space=vmem, size = 0x24000, scoped, tag = 'input window, operand 2, single buffered']
    #allocation8 [shape = 'u8[32768]{0}', space=vmem, size = 0x8000, scoped, tag = 'input window, operand 9, single buffered']
    #allocation9 [shape = 's32[1]{0}', space=sflag, size = 0x4, scoped, tag = 'scoped memory for tpu_custom_call.1']
    #allocation10 [shape = 'u8[32768]{0}', space=vmem, size = 0x8000, scoped, tag = 'input window, operand 10, single buffered']
    #allocation11 [shape = 'u8[16384]{0}', space=vmem, size = 0x4000, scoped, tag = 'output window, operand 0, single buffered']
    #allocation12 [shape = 'u8[16384]{0}', space=vmem, size = 0x4000, scoped, tag = 'output window, operand 1, single buffered']
    #allocation13 [shape = 's32[1]{0}', space=sflag, size = 0x4, scoped, tag = 'scoped memory for tpu_custom_call.1']
    %21 = vsyncpa [#allocation3], 0
    %22 = vsyncpa [#allocation6], 0
    %23 = vsyncpa [#allocation9], 0
    %24 = vsyncpa [#allocation4], 0
    %25 = vsyncpa [#allocation13], 0
    // Predicated region
    $region2: #{tpu_custom_call.1} parent=1 // pred_check
      _
    $region3: #{tpu_custom_call.1} parent=1 // pred_check_branch
      %27 = sbr.rel (0) target = $region5
    $region4: #{tpu_custom_call.1} parent=1 // pred_region
      %s29 = ssub.s32 512, 512
      %30 = vsyncadd [#allocation3], %s29
      %s31 = sshll.u32 [#allocation2], 4
      %s32 = int_to_ptr.vmem [resolvable:$true] %s31
      %37 = dma.hbm_to_vmem [thread:$0]  %s0, 512, %s32, [#allocation3], 256, 256, 16
    $region5: #{tpu_custom_call.1} parent=1 // pred_fallthru
      _
    // Predicated region
    $region6: #{tpu_custom_call.1} parent=1 // pred_check
      _
    $region7: #{tpu_custom_call.1} parent=1 // pred_check_branch
      %39 = sbr.rel (0) target = $region9
    $region8: #{tpu_custom_call.1} parent=1 // pred_region
      %s41 = ssub.s32 512, 512
      %42 = vsyncadd [#allocation6], %s41
      %s43 = sshll.u32 [#allocation5], 4
      %s44 = int_to_ptr.vmem [resolvable:$true] %s43
      %49 = dma.hbm_to_vmem [thread:$0]  %s1, 512, %s44, [#allocation6], 256, 256, 16
    $region9: #{tpu_custom_call.1} parent=1 // pred_fallthru
      _
    // Predicated region
    $region10: #{tpu_custom_call.1} parent=1 // pred_check
      _
    $region11: #{tpu_custom_call.1} parent=1 // pred_check_branch
      %51 = sbr.rel (0) target = $region13
    $region12: #{tpu_custom_call.1} parent=1 // pred_region
      %s53 = ssub.s32 4608, 4608
      %54 = vsyncadd [#allocation6], %s53
      %s55 = sshll.u32 [#allocation7], 4
      %s56 = int_to_ptr.vmem [resolvable:$true] %s55
      %61 = dma.hbm_to_vmem [thread:$0]  %s2, 4608, %s56, [#allocation6], 256, 256, 16
    $region13: #{tpu_custom_call.1} parent=1 // pred_fallthru
      _
    // Predicated region
    $region14: #{tpu_custom_call.1} parent=1 // pred_check
      _
    $region15: #{tpu_custom_call.1} parent=1 // pred_check_branch
      %63 = sbr.rel (0) target = $region17
    $region16: #{tpu_custom_call.1} parent=1 // pred_region
      _
    $region17: #{tpu_custom_call.1} parent=1 // pred_fallthru
      _
    // Predicated region
    $region18: #{tpu_custom_call.1} parent=1 // pred_check
      _
    $region19: #{tpu_custom_call.1} parent=1 // pred_check_branch
      %65 = sbr.rel (0) target = $region21
    $region20: #{tpu_custom_call.1} parent=1 // pred_region
      _
    $region21: #{tpu_custom_call.1} parent=1 // pred_fallthru
      _
    // Predicated region
    $region22: #{tpu_custom_call.1} parent=1 // pred_check
      _
    $region23: #{tpu_custom_call.1} parent=1 // pred_check_branch
      %67 = sbr.rel (0) target = $region25
    $region24: #{tpu_custom_call.1} parent=1 // pred_region
      _
    $region25: #{tpu_custom_call.1} parent=1 // pred_fallthru
      _
    // Predicated region
    $region26: #{tpu_custom_call.1} parent=1 // pred_check
      _
    $region27: #{tpu_custom_call.1} parent=1 // pred_check_branch
      %69 = sbr.rel (0) target = $region29
    $region28: #{tpu_custom_call.1} parent=1 // pred_region
      _
    $region29: #{tpu_custom_call.1} parent=1 // pred_fallthru
      _
    // Predicated region
    $region30: #{tpu_custom_call.1} parent=1 // pred_check
      _
    $region31: #{tpu_custom_call.1} parent=1 // pred_check_branch
      %71 = sbr.rel (0) target = $region33
    $region32: #{tpu_custom_call.1} parent=1 // pred_region
      _
    $region33: #{tpu_custom_call.1} parent=1 // pred_fallthru
      _
    // Predicated region
    $region34: #{tpu_custom_call.1} parent=1 // pred_check
      _
    $region35: #{tpu_custom_call.1} parent=1 // pred_check_branch
      %73 = sbr.rel (0) target = $region37
    $region36: #{tpu_custom_call.1} parent=1 // pred_region
      _
    $region37: #{tpu_custom_call.1} parent=1 // pred_fallthru
      _
    // Predicated region
    $region38: #{tpu_custom_call.1} parent=1 // pred_check
      _
    $region39: #{tpu_custom_call.1} parent=1 // pred_check_branch
      %75 = sbr.rel (0) target = $region41
    $region40: #{tpu_custom_call.1} parent=1 // pred_region
      %s77 = ssub.s32 1024, 1024
      %78 = vsyncadd [#allocation9], %s77
      %s79 = sshll.u32 [#allocation8], 4
      %s80 = int_to_ptr.vmem [resolvable:$true] %s79
      %85 = dma.hbm_to_vmem [thread:$0]  %s9, 1024, %s80, [#allocation9], 256, 256, 16
    $region41: #{tpu_custom_call.1} parent=1 // pred_fallthru
      _
    // Predicated region
    $region42: #{tpu_custom_call.1} parent=1 // pred_check
      _
    $region43: #{tpu_custom_call.1} parent=1 // pred_check_branch
      %87 = sbr.rel (0) target = $region45
    $region44: #{tpu_custom_call.1} parent=1 // pred_region
      %s89 = ssub.s32 1024, 1024
      %90 = vsyncadd [#allocation9], %s89
      %s91 = sshll.u32 [#allocation10], 4
      %s92 = int_to_ptr.vmem [resolvable:$true] %s91
      %97 = dma.hbm_to_vmem [thread:$0]  %s10, 1024, %s92, [#allocation9], 256, 256, 16
    $region45: #{tpu_custom_call.1} parent=1 // pred_fallthru
      _
    // Predicated region
    $region46: #{tpu_custom_call.1} parent=1 // pred_check
      _
    $region47: #{tpu_custom_call.1} parent=1 // pred_check_branch
      %99 = sbr.rel (0) target = $region49
    $region48: #{tpu_custom_call.1} parent=1 // pred_region
      _
    $region49: #{tpu_custom_call.1} parent=1 // pred_fallthru
      _
    // Predicated region
    $region50: #{tpu_custom_call.1} parent=1 // pred_check
      _
    $region51: #{tpu_custom_call.1} parent=1 // pred_check_branch
      %101 = sbr.rel (0) target = $region53
    $region52: #{tpu_custom_call.1} parent=1 // pred_region
      _
    $region53: #{tpu_custom_call.1} parent=1 // pred_fallthru
      _
    // Predicated region
    $region54: #{tpu_custom_call.1} parent=1 // pred_check
      _
    $region55: #{tpu_custom_call.1} parent=1 // pred_check_branch
      %103 = sbr.rel (0) target = $region57
    $region56: #{tpu_custom_call.1} parent=1 // pred_region
      _
    $region57: #{tpu_custom_call.1} parent=1 // pred_fallthru
      _
    // Predicated region
    $region58: #{tpu_custom_call.1} parent=1 // pred_check
      _
    $region59: #{tpu_custom_call.1} parent=1 // pred_check_branch
      %105 = sbr.rel (0) target = $region61
    $region60: #{tpu_custom_call.1} parent=1 // pred_region
      %106 = dma.done [#allocation3], 512
    $region61: #{tpu_custom_call.1} parent=1 // pred_fallthru
      _
    // Predicated region
    $region62: #{tpu_custom_call.1} parent=1 // pred_check
      _
    $region63: #{tpu_custom_call.1} parent=1 // pred_check_branch
      %108 = sbr.rel (0) target = $region65
    $region64: #{tpu_custom_call.1} parent=1 // pred_region
      %109 = dma.done [#allocation6], 512
    $region65: #{tpu_custom_call.1} parent=1 // pred_fallthru
      _
    // Predicated region
    $region66: #{tpu_custom_call.1} parent=1 // pred_check
      _
    $region67: #{tpu_custom_call.1} parent=1 // pred_check_branch
      %111 = sbr.rel (0) target = $region69
    $region68: #{tpu_custom_call.1} parent=1 // pred_region
      %112 = dma.done [#allocation6], 4608
    $region69: #{tpu_custom_call.1} parent=1 // pred_fallthru
      _
    // Predicated region
    $region70: #{tpu_custom_call.1} parent=1 // pred_check
      _
    $region71: #{tpu_custom_call.1} parent=1 // pred_check_branch
      %114 = sbr.rel (0) target = $region73
    $region72: #{tpu_custom_call.1} parent=1 // pred_region
      %115 = dma.done [#allocation9], 1024
    $region73: #{tpu_custom_call.1} parent=1 // pred_fallthru
      _
    // Predicated region
    $region74: #{tpu_custom_call.1} parent=1 // pred_check
      _
    $region75: #{tpu_custom_call.1} parent=1 // pred_check_branch
      %117 = sbr.rel (0) target = $region77
    $region76: #{tpu_custom_call.1} parent=1 // pred_region
      %118 = dma.done [#allocation9], 1024
    $region77: #{tpu_custom_call.1} parent=1 // pred_fallthru
      _
    %v119 = vld [vmem:[%s3] sm:$0xff]
    %v120 = vld [vmem:[%s3 + $0x8] sm:$0xff]
    %v121 = vld [vmem:[%s3 + $0x10] sm:$0xff]
    %v122 = vld [vmem:[%s3 + $0x18] sm:$0xff]
    %v123 = vld [vmem:[%s3 + $0x20] sm:$0xff]
    %v124 = vld [vmem:[%s3 + $0x28] sm:$0xff]
    %v125 = vld [vmem:[%s3 + $0x30] sm:$0xff]
    %v126 = vld [vmem:[%s3 + $0x38] sm:$0xff]
    %v127 = vld [vmem:[%s3 + $0x40] sm:$0xff]
    %v128 = vld [vmem:[%s3 + $0x48] sm:$0xff]
    %v129 = vld [vmem:[%s3 + $0x50] sm:$0xff]
    %v130 = vld [vmem:[%s3 + $0x58] sm:$0xff]
    %v131 = vld [vmem:[%s3 + $0x60] sm:$0xff]
    %v132 = vld [vmem:[%s3 + $0x68] sm:$0xff]
    %v133 = vld [vmem:[%s3 + $0x70] sm:$0xff]
    %v134 = vld [vmem:[%s3 + $0x78] sm:$0xff]
    %v135 = vld [vmem:[%s3 + $0x80] sm:$0xff]
    %v136 = vld [vmem:[%s3 + $0x88] sm:$0xff]
    %v137 = vld [vmem:[#allocation7] sm:$0xff]
    %v138 = vld [vmem:[#allocation7 + $0x8] sm:$0xff]
    %v139 = vld [vmem:[#allocation7 + $0x10] sm:$0xff]
    %v140 = vld [vmem:[#allocation7 + $0x18] sm:$0xff]
    %v141 = vld [vmem:[#allocation7 + $0x20] sm:$0xff]
    %v142 = vld [vmem:[#allocation7 + $0x28] sm:$0xff]
    %v143 = vld [vmem:[#allocation7 + $0x30] sm:$0xff]
    %v144 = vld [vmem:[#allocation7 + $0x38] sm:$0xff]
    %v145 = vld [vmem:[#allocation7 + $0x40] sm:$0xff]
    %v146 = vld [vmem:[#allocation7 + $0x48] sm:$0xff]
    %v147 = vld [vmem:[#allocation7 + $0x50] sm:$0xff]
    %v148 = vld [vmem:[#allocation7 + $0x58] sm:$0xff]
    %v149 = vld [vmem:[#allocation7 + $0x60] sm:$0xff]
    %v150 = vld [vmem:[#allocation7 + $0x68] sm:$0xff]
    %v151 = vld [vmem:[#allocation7 + $0x70] sm:$0xff]
    %v152 = vld [vmem:[#allocation7 + $0x78] sm:$0xff]
    %v153 = vld [vmem:[#allocation7 + $0x80] sm:$0xff]
    %v154 = vld [vmem:[#allocation7 + $0x88] sm:$0xff]
    %v155 = vld [vmem:[#allocation7 + $0x90] sm:$0xff]
    %v156 = vld [vmem:[#allocation7 + $0x98] sm:$0xff]
    %v157 = vld [vmem:[#allocation7 + $0xa0] sm:$0xff]
    %v158 = vld [vmem:[#allocation7 + $0xa8] sm:$0xff]
    %v159 = vld [vmem:[#allocation7 + $0xb0] sm:$0xff]
    %v160 = vld [vmem:[#allocation7 + $0xb8] sm:$0xff]
    %v161 = vld [vmem:[#allocation7 + $0xc0] sm:$0xff]
    %v162 = vld [vmem:[#allocation7 + $0xc8] sm:$0xff]
    %v163 = vld [vmem:[#allocation7 + $0xd0] sm:$0xff]
    %v164 = vld [vmem:[#allocation7 + $0xd8] sm:$0xff]
    %v165 = vld [vmem:[#allocation7 + $0xe0] sm:$0xff]
    %v166 = vld [vmem:[#allocation7 + $0xe8] sm:$0xff]
    %v167 = vld [vmem:[#allocation7 + $0xf0] sm:$0xff]
    %v168 = vld [vmem:[#allocation7 + $0xf8] sm:$0xff]
    %v169 = vld [vmem:[#allocation7 + $0x100] sm:$0xff]
    %v170 = vld [vmem:[#allocation7 + $0x108] sm:$0xff]
    %v171 = vld [vmem:[#allocation7 + $0x110] sm:$0xff]
    %v172 = vld [vmem:[#allocation7 + $0x118] sm:$0xff]
    %v173 = vld [vmem:[#allocation2] sm:$0xff]
    %v174 = vld [vmem:[#allocation2 + $0x8] sm:$0xff]
    %v175 = vld [vmem:[#allocation2 + $0x10] sm:$0x1]
    %v176 = vld [vmem:[#allocation2 + $0x18] sm:$0x1]
    %vm177 = vcmask 72704
    %v179 = vsel %vm177, %v119, 0
    %v182 = vsel %vm177, %v120, 0
    %v185 = vsel %vm177, %v121, 0
    %v188 = vsel %vm177, %v122, 0
    %v191 = vsel %vm177, %v123, 0
    %v194 = vsel %vm177, %v124, 0
    %v197 = vsel %vm177, %v125, 0
    %v200 = vsel %vm177, %v126, 0
    %v203 = vsel %vm177, %v127, 0
    %v206 = vsel %vm177, %v128, 0
    %v209 = vsel %vm177, %v129, 0
    %v212 = vsel %vm177, %v130, 0
    %v215 = vsel %vm177, %v131, 0
    %v218 = vsel %vm177, %v132, 0
    %v221 = vsel %vm177, %v133, 0
    %v224 = vsel %vm177, %v134, 0
    %v227 = vsel %vm177, %v135, 0
    %v230 = vsel %vm177, %v136, 0
    %vm232 = vcmask 1040384
    %v234 = vsel %vm232, %v175, 0
    %v237 = vsel %vm232, %v176, 0
    %239 = vmatprep.subr.mxu0 %v174
    %240 = vmatpush1.msra.mxu0 %v173
    %241 = vmatprep.subr.mxu0 %v237
    %242 = vmatpush1.msra.mxu0 %v234
    %243 = vmatprep.subr.mxu0 0.0
    %244 = vmatpush1.msra.mxu0 0.0
    %245 = vmatprep.subr.mxu0 0.0
    %246 = vmatpush1.msra.mxu0 0.0
    %247 = vmatprep.subr.mxu0 0.0
    %248 = vmatpush1.msra.mxu0 0.0
    %249 = vmatprep.subr.mxu0 0.0
    %250 = vmatpush1.msra.mxu0 0.0
    %251 = vmatprep.subr.mxu0 0.0
    %252 = vmatpush1.msra.mxu0 0.0
    %253 = vmatprep.subr.mxu0 0.0
    %254 = vmatpush1.msra.mxu0 0.0
    %255 = vmatprep.subr.mxu0 0.0
    %256 = vmatpush1.msra.mxu0 0.0
    %257 = vmatprep.subr.mxu0 0.0
    %258 = vmatpush1.msra.mxu0 0.0
    %259 = vmatprep.subr.mxu0 0.0
    %260 = vmatpush1.msra.mxu0 0.0
    %261 = vmatprep.subr.mxu0 0.0
    %262 = vmatpush1.msra.mxu0 0.0
    %263 = vmatprep.subr.mxu0 0.0
    %264 = vmatpush1.msra.mxu0 0.0
    %265 = vmatprep.subr.mxu0 0.0
    %266 = vmatpush1.msra.mxu0 0.0
    %267 = vmatprep.subr.mxu0 0.0
    %268 = vmatpush1.msra.mxu0 0.0
    %269 = vmatprep.subr.mxu0 0.0
    %270 = vmatpush1.msra.mxu0 0.0
    %271 = vmatprep.subr.mxu0 0.0
    %272 = vmatpush1.msra.mxu0 0.0
    %273 = vmatprep.subr.mxu0 0.0
    %274 = vmatpush1.msra.mxu0 0.0
    %275 = vmatprep.subr.mxu0 0.0
    %276 = vmatpush1.msra.mxu0 0.0
    %277 = vmatprep.subr.mxu0 0.0
    %278 = vmatpush1.msra.mxu0 0.0
    %279 = vmatprep.subr.mxu0 0.0
    %280 = vmatpush1.msra.mxu0 0.0
    %281 = vmatprep.subr.mxu0 0.0
    %282 = vmatpush1.msra.mxu0 0.0
    %283 = vmatprep.subr.mxu0 0.0
    %284 = vmatpush1.msra.mxu0 0.0
    %285 = vmatprep.subr.mxu0 0.0
    %286 = vmatpush1.msra.mxu0 0.0
    %287 = vmatprep.subr.mxu0 0.0
    %288 = vmatpush1.msra.mxu0 0.0
    %289 = vmatprep.subr.mxu0 0.0
    %290 = vmatpush1.msra.mxu0 0.0
    %291 = vmatprep.subr.mxu0 0.0
    %292 = vmatpush1.msra.mxu0 0.0
    %293 = vmatprep.subr.mxu0 0.0
    %294 = vmatpush1.msra.mxu0 0.0
    %295 = vmatprep.subr.mxu0 0.0
    %296 = vmatpush1.msra.mxu0 0.0
    %297 = vmatprep.subr.mxu0 0.0
    %298 = vmatpush1.msra.mxu0 0.0
    %299 = vmatprep.subr.mxu0 0.0
    %300 = vmatpush1.msra.mxu0 0.0
    %301 = vmatprep.subr.mxu0 0.0
    %302 = vmatpush1.msra.mxu0 0.0
    %303 = vmatprep.mubr.f32.mxu0 0.0
    %304 = vmatmul.mubr.f32.gmra.mrb[0].mxu0 %v179
    %v305 = vpop.f32.mrb[0].mxu0
    %v306 = vadd.f32 0.0, %v305
    %v307 = vpop.f32.mrb[0].mxu0
    %v308 = vadd.f32 0.0, %v307
    %309 = vmatprep.mubr.f32.mxu0 0.0
    %310 = vmatmul.mubr.f32.gmra.mrb[0].mxu0 %v182
    %v311 = vpop.f32.mrb[0].mxu0
    %v312 = vadd.f32 0.0, %v311
    %v313 = vpop.f32.mrb[0].mxu0
    %v314 = vadd.f32 0.0, %v313
    %315 = vmatprep.mubr.f32.mxu0 0.0
    %316 = vmatmul.mubr.f32.gmra.mrb[0].mxu0 %v185
    %v317 = vpop.f32.mrb[0].mxu0
    %v318 = vadd.f32 0.0, %v317
    %v319 = vpop.f32.mrb[0].mxu0
    %v320 = vadd.f32 0.0, %v319
    %321 = vmatprep.mubr.f32.mxu0 0.0
    %322 = vmatmul.mubr.f32.gmra.mrb[0].mxu0 %v188
    %v323 = vpop.f32.mrb[0].mxu0
    %v324 = vadd.f32 0.0, %v323
    %v325 = vpop.f32.mrb[0].mxu0
    %v326 = vadd.f32 0.0, %v325
    %327 = vmatprep.mubr.f32.mxu0 0.0
    %328 = vmatmul.mubr.f32.gmra.mrb[0].mxu0 %v191
    %v329 = vpop.f32.mrb[0].mxu0
    %v330 = vadd.f32 0.0, %v329
    %v331 = vpop.f32.mrb[0].mxu0
    %v332 = vadd.f32 0.0, %v331
    %333 = vmatprep.mubr.f32.mxu0 0.0
    %334 = vmatmul.mubr.f32.gmra.mrb[0].mxu0 %v194
    %v335 = vpop.f32.mrb[0].mxu0
    %v336 = vadd.f32 0.0, %v335
    %v337 = vpop.f32.mrb[0].mxu0
    %v338 = vadd.f32 0.0, %v337
    %339 = vmatprep.mubr.f32.mxu0 0.0
    %340 = vmatmul.mubr.f32.gmra.mrb[0].mxu0 %v197
    %v341 = vpop.f32.mrb[0].mxu0
    %v342 = vadd.f32 0.0, %v341
    %v343 = vpop.f32.mrb[0].mxu0
    %v344 = vadd.f32 0.0, %v343
    %345 = vmatprep.mubr.f32.mxu0 0.0
    %346 = vmatmul.mubr.f32.gmra.mrb[0].mxu0 %v200
    %v347 = vpop.f32.mrb[0].mxu0
    %v348 = vadd.f32 0.0, %v347
    %v349 = vpop.f32.mrb[0].mxu0
    %v350 = vadd.f32 0.0, %v349
    %351 = vmatprep.mubr.f32.mxu0 0.0
    %352 = vmatmul.mubr.f32.gmra.mrb[0].mxu0 %v203
    %v353 = vpop.f32.mrb[0].mxu0
    %v354 = vadd.f32 0.0, %v353
    %v355 = vpop.f32.mrb[0].mxu0
    %v356 = vadd.f32 0.0, %v355
    %357 = vmatprep.mubr.f32.mxu0 0.0
    %358 = vmatmul.mubr.f32.gmra.mrb[0].mxu0 %v206
    %v359 = vpop.f32.mrb[0].mxu0
    %v360 = vadd.f32 0.0, %v359
    %v361 = vpop.f32.mrb[0].mxu0
    %v362 = vadd.f32 0.0, %v361
    %363 = vmatprep.mubr.f32.mxu0 0.0
    %364 = vmatmul.mubr.f32.gmra.mrb[0].mxu0 %v209
    %v365 = vpop.f32.mrb[0].mxu0
    %v366 = vadd.f32 0.0, %v365
    %v367 = vpop.f32.mrb[0].mxu0
    %v368 = vadd.f32 0.0, %v367
    %369 = vmatprep.mubr.f32.mxu0 0.0
    %370 = vmatmul.mubr.f32.gmra.mrb[0].mxu0 %v212
    %v371 = vpop.f32.mrb[0].mxu0
    %v372 = vadd.f32 0.0, %v371
    %v373 = vpop.f32.mrb[0].mxu0
    %v374 = vadd.f32 0.0, %v373
    %375 = vmatprep.mubr.f32.mxu0 0.0
    %376 = vmatmul.mubr.f32.gmra.mrb[0].mxu0 %v215
    %v377 = vpop.f32.mrb[0].mxu0
    %v378 = vadd.f32 0.0, %v377
    %v379 = vpop.f32.mrb[0].mxu0
    %v380 = vadd.f32 0.0, %v379
    %381 = vmatprep.mubr.f32.mxu0 0.0
    %382 = vmatmul.mubr.f32.gmra.mrb[0].mxu0 %v218
    %v383 = vpop.f32.mrb[0].mxu0
    %v384 = vadd.f32 0.0, %v383
    %v385 = vpop.f32.mrb[0].mxu0
    %v386 = vadd.f32 0.0, %v385
    %387 = vmatprep.mubr.f32.mxu0 0.0
    %388 = vmatmul.mubr.f32.gmra.mrb[0].mxu0 %v221
    %v389 = vpop.f32.mrb[0].mxu0
    %v390 = vadd.f32 0.0, %v389
    %v391 = vpop.f32.mrb[0].mxu0
    %v392 = vadd.f32 0.0, %v391
    %393 = vmatprep.mubr.f32.mxu0 0.0
    %394 = vmatmul.mubr.f32.gmra.mrb[0].mxu0 %v224
    %v395 = vpop.f32.mrb[0].mxu0
    %v396 = vadd.f32 0.0, %v395
    %v397 = vpop.f32.mrb[0].mxu0
    %v398 = vadd.f32 0.0, %v397
    %399 = vmatprep.mubr.f32.mxu0 0.0
    %400 = vmatmul.mubr.f32.gmra.mrb[0].mxu0 %v227
    %v401 = vpop.f32.mrb[0].mxu0
    %v402 = vadd.f32 0.0, %v401
    %v403 = vpop.f32.mrb[0].mxu0
    %v404 = vadd.f32 0.0, %v403
    %405 = vmatprep.mubr.f32.mxu0 0.0
    %406 = vmatmul.mubr.f32.gmra.mrb[0].mxu0 %v230
    %v407 = vpop.f32.mrb[0].mxu0
    %v408 = vadd.f32 0.0, %v407
    %v409 = vpop.f32.mrb[0].mxu0
    %v410 = vadd.f32 0.0, %v409
    %411 = vdwg.mxu0
    %v412 = vmul.f32 %v306, %v137
    %v413 = vmul.f32 %v308, %v138
    %v414 = vmul.f32 %v312, %v139
    %v415 = vmul.f32 %v314, %v140
    %v416 = vmul.f32 %v318, %v141
    %v417 = vmul.f32 %v320, %v142
    %v418 = vmul.f32 %v324, %v143
    %v419 = vmul.f32 %v326, %v144
    %v420 = vmul.f32 %v330, %v145
    %v421 = vmul.f32 %v332, %v146
    %v422 = vmul.f32 %v336, %v147
    %v423 = vmul.f32 %v338, %v148
    %v424 = vmul.f32 %v342, %v149
    %v425 = vmul.f32 %v344, %v150
    %v426 = vmul.f32 %v348, %v151
    %v427 = vmul.f32 %v350, %v152
    %v428 = vmul.f32 %v354, %v153
    %v429 = vmul.f32 %v356, %v154
    %v430 = vmul.f32 %v360, %v155
    %v431 = vmul.f32 %v362, %v156
    %v432 = vmul.f32 %v366, %v157
    %v433 = vmul.f32 %v368, %v158
    %v434 = vmul.f32 %v372, %v159
    %v435 = vmul.f32 %v374, %v160
    %v436 = vmul.f32 %v378, %v161
    %v437 = vmul.f32 %v380, %v162
    %v438 = vmul.f32 %v384, %v163
    %v439 = vmul.f32 %v386, %v164
    %v440 = vmul.f32 %v390, %v165
    %v441 = vmul.f32 %v392, %v166
    %v442 = vmul.f32 %v396, %v167
    %v443 = vmul.f32 %v398, %v168
    %v444 = vmul.f32 %v402, %v169
    %v445 = vmul.f32 %v404, %v170
    %v446 = vmul.f32 %v408, %v171
    %v447 = vmul.f32 %v410, %v172
    %v448 = vld [vmem:[#allocation5] sm:$0xff]
    %v449 = vld [vmem:[#allocation5 + $0x8] sm:$0xff]
    %v450 = vld [vmem:[#allocation5 + $0x10] sm:$0x1]
    %v451 = vld [vmem:[#allocation5 + $0x18] sm:$0x1]
    %v453 = vsel %vm232, %v450, 0
    %v456 = vsel %vm232, %v451, 0
    %458 = vmatprep.subr.mxu0 %v449
    %459 = vmatpush1.msra.mxu0 %v448
    %460 = vmatprep.subr.mxu0 %v456
    %461 = vmatpush1.msra.mxu0 %v453
    %462 = vmatprep.subr.mxu0 0.0
    %463 = vmatpush1.msra.mxu0 0.0
    %464 = vmatprep.subr.mxu0 0.0
    %465 = vmatpush1.msra.mxu0 0.0
    %466 = vmatprep.subr.mxu0 0.0
    %467 = vmatpush1.msra.mxu0 0.0
    %468 = vmatprep.subr.mxu0 0.0
    %469 = vmatpush1.msra.mxu0 0.0
    %470 = vmatprep.subr.mxu0 0.0
    %471 = vmatpush1.msra.mxu0 0.0
    %472 = vmatprep.subr.mxu0 0.0
    %473 = vmatpush1.msra.mxu0 0.0
    %474 = vmatprep.subr.mxu0 0.0
    %475 = vmatpush1.msra.mxu0 0.0
    %476 = vmatprep.subr.mxu0 0.0
    %477 = vmatpush1.msra.mxu0 0.0
    %478 = vmatprep.subr.mxu0 0.0
    %479 = vmatpush1.msra.mxu0 0.0
    %480 = vmatprep.subr.mxu0 0.0
    %481 = vmatpush1.msra.mxu0 0.0
    %482 = vmatprep.subr.mxu0 0.0
    %483 = vmatpush1.msra.mxu0 0.0
    %484 = vmatprep.subr.mxu0 0.0
    %485 = vmatpush1.msra.mxu0 0.0
    %486 = vmatprep.subr.mxu0 0.0
    %487 = vmatpush1.msra.mxu0 0.0
    %488 = vmatprep.subr.mxu0 0.0
    %489 = vmatpush1.msra.mxu0 0.0
    %490 = vmatprep.subr.mxu0 0.0
    %491 = vmatpush1.msra.mxu0 0.0
    %492 = vmatprep.subr.mxu0 0.0
    %493 = vmatpush1.msra.mxu0 0.0
    %494 = vmatprep.subr.mxu0 0.0
    %495 = vmatpush1.msra.mxu0 0.0
    %496 = vmatprep.subr.mxu0 0.0
    %497 = vmatpush1.msra.mxu0 0.0
    %498 = vmatprep.subr.mxu0 0.0
    %499 = vmatpush1.msra.mxu0 0.0
    %500 = vmatprep.subr.mxu0 0.0
    %501 = vmatpush1.msra.mxu0 0.0
    %502 = vmatprep.subr.mxu0 0.0
    %503 = vmatpush1.msra.mxu0 0.0
    %504 = vmatprep.subr.mxu0 0.0
    %505 = vmatpush1.msra.mxu0 0.0
    %506 = vmatprep.subr.mxu0 0.0
    %507 = vmatpush1.msra.mxu0 0.0
    %508 = vmatprep.subr.mxu0 0.0
    %509 = vmatpush1.msra.mxu0 0.0
    %510 = vmatprep.subr.mxu0 0.0
    %511 = vmatpush1.msra.mxu0 0.0
    %512 = vmatprep.subr.mxu0 0.0
    %513 = vmatpush1.msra.mxu0 0.0
    %514 = vmatprep.subr.mxu0 0.0
    %515 = vmatpush1.msra.mxu0 0.0
    %516 = vmatprep.subr.mxu0 0.0
    %517 = vmatpush1.msra.mxu0 0.0
    %518 = vmatprep.subr.mxu0 0.0
    %519 = vmatpush1.msra.mxu0 0.0
    %520 = vmatprep.subr.mxu0 0.0
    %521 = vmatpush1.msra.mxu0 0.0
    %522 = vmatprep.mubr.f32.mxu0 0.0
    %523 = vmatmul.mubr.f32.gmra.mrb[0].mxu0 %v179
    %v524 = vpop.f32.mrb[0].mxu0
    %v525 = vadd.f32 0.0, %v524
    %v526 = vpop.f32.mrb[0].mxu0
    %v527 = vadd.f32 0.0, %v526
    %528 = vmatprep.mubr.f32.mxu0 0.0
    %529 = vmatmul.mubr.f32.gmra.mrb[0].mxu0 %v182
    %v530 = vpop.f32.mrb[0].mxu0
    %v531 = vadd.f32 0.0, %v530
    %v532 = vpop.f32.mrb[0].mxu0
    %v533 = vadd.f32 0.0, %v532
    %534 = vmatprep.mubr.f32.mxu0 0.0
    %535 = vmatmul.mubr.f32.gmra.mrb[0].mxu0 %v185
    %v536 = vpop.f32.mrb[0].mxu0
    %v537 = vadd.f32 0.0, %v536
    %v538 = vpop.f32.mrb[0].mxu0
    %v539 = vadd.f32 0.0, %v538
    %540 = vmatprep.mubr.f32.mxu0 0.0
    %541 = vmatmul.mubr.f32.gmra.mrb[0].mxu0 %v188
    %v542 = vpop.f32.mrb[0].mxu0
    %v543 = vadd.f32 0.0, %v542
    %v544 = vpop.f32.mrb[0].mxu0
    %v545 = vadd.f32 0.0, %v544
    %546 = vmatprep.mubr.f32.mxu0 0.0
    %547 = vmatmul.mubr.f32.gmra.mrb[0].mxu0 %v191
    %v548 = vpop.f32.mrb[0].mxu0
    %v549 = vadd.f32 0.0, %v548
    %v550 = vpop.f32.mrb[0].mxu0
    %v551 = vadd.f32 0.0, %v550
    %552 = vmatprep.mubr.f32.mxu0 0.0
    %553 = vmatmul.mubr.f32.gmra.mrb[0].mxu0 %v194
    %v554 = vpop.f32.mrb[0].mxu0
    %v555 = vadd.f32 0.0, %v554
    %v556 = vpop.f32.mrb[0].mxu0
    %v557 = vadd.f32 0.0, %v556
    %558 = vmatprep.mubr.f32.mxu0 0.0
    %559 = vmatmul.mubr.f32.gmra.mrb[0].mxu0 %v197
    %v560 = vpop.f32.mrb[0].mxu0
    %v561 = vadd.f32 0.0, %v560
    %v562 = vpop.f32.mrb[0].mxu0
    %v563 = vadd.f32 0.0, %v562
    %564 = vmatprep.mubr.f32.mxu0 0.0
    %565 = vmatmul.mubr.f32.gmra.mrb[0].mxu0 %v200
    %v566 = vpop.f32.mrb[0].mxu0
    %v567 = vadd.f32 0.0, %v566
    %v568 = vpop.f32.mrb[0].mxu0
    %v569 = vadd.f32 0.0, %v568
    %570 = vmatprep.mubr.f32.mxu0 0.0
    %571 = vmatmul.mubr.f32.gmra.mrb[0].mxu0 %v203
    %v572 = vpop.f32.mrb[0].mxu0
    %v573 = vadd.f32 0.0, %v572
    %v574 = vpop.f32.mrb[0].mxu0
    %v575 = vadd.f32 0.0, %v574
    %576 = vmatprep.mubr.f32.mxu0 0.0
    %577 = vmatmul.mubr.f32.gmra.mrb[0].mxu0 %v206
    %v578 = vpop.f32.mrb[0].mxu0
    %v579 = vadd.f32 0.0, %v578
    %v580 = vpop.f32.mrb[0].mxu0
    %v581 = vadd.f32 0.0, %v580
    %582 = vmatprep.mubr.f32.mxu0 0.0
    %583 = vmatmul.mubr.f32.gmra.mrb[0].mxu0 %v209
    %v584 = vpop.f32.mrb[0].mxu0
    %v585 = vadd.f32 0.0, %v584
    %v586 = vpop.f32.mrb[0].mxu0
    %v587 = vadd.f32 0.0, %v586
    %588 = vmatprep.mubr.f32.mxu0 0.0
    %589 = vmatmul.mubr.f32.gmra.mrb[0].mxu0 %v212
    %v590 = vpop.f32.mrb[0].mxu0
    %v591 = vadd.f32 0.0, %v590
    %v592 = vpop.f32.mrb[0].mxu0
    %v593 = vadd.f32 0.0, %v592
    %594 = vmatprep.mubr.f32.mxu0 0.0
    %595 = vmatmul.mubr.f32.gmra.mrb[0].mxu0 %v215
    %v596 = vpop.f32.mrb[0].mxu0
    %v597 = vadd.f32 0.0, %v596
    %v598 = vpop.f32.mrb[0].mxu0
    %v599 = vadd.f32 0.0, %v598
    %600 = vmatprep.mubr.f32.mxu0 0.0
    %601 = vmatmul.mubr.f32.gmra.mrb[0].mxu0 %v218
    %v602 = vpop.f32.mrb[0].mxu0
    %v603 = vadd.f32 0.0, %v602
    %v604 = vpop.f32.mrb[0].mxu0
    %v605 = vadd.f32 0.0, %v604
    %606 = vmatprep.mubr.f32.mxu0 0.0
    %607 = vmatmul.mubr.f32.gmra.mrb[0].mxu0 %v221
    %v608 = vpop.f32.mrb[0].mxu0
    %v609 = vadd.f32 0.0, %v608
    %v610 = vpop.f32.mrb[0].mxu0
    %v611 = vadd.f32 0.0, %v610
    %612 = vmatprep.mubr.f32.mxu0 0.0
    %613 = vmatmul.mubr.f32.gmra.mrb[0].mxu0 %v224
    %v614 = vpop.f32.mrb[0].mxu0
    %v615 = vadd.f32 0.0, %v614
    %v616 = vpop.f32.mrb[0].mxu0
    %v617 = vadd.f32 0.0, %v616
    %618 = vmatprep.mubr.f32.mxu0 0.0
    %619 = vmatmul.mubr.f32.gmra.mrb[0].mxu0 %v227
    %v620 = vpop.f32.mrb[0].mxu0
    %v621 = vadd.f32 0.0, %v620
    %v622 = vpop.f32.mrb[0].mxu0
    %v623 = vadd.f32 0.0, %v622
    %624 = vmatprep.mubr.f32.mxu0 0.0
    %625 = vmatmul.mubr.f32.gmra.mrb[0].mxu0 %v230
    %v626 = vpop.f32.mrb[0].mxu0
    %v627 = vadd.f32 0.0, %v626
    %v628 = vpop.f32.mrb[0].mxu0
    %v629 = vadd.f32 0.0, %v628
    %630 = vdwg.mxu0
    %v631 = vmul.f32 %v525, %v137
    %v632 = vmul.f32 %v527, %v138
    %v633 = vmul.f32 %v531, %v139
    %v634 = vmul.f32 %v533, %v140
    %v635 = vmul.f32 %v537, %v141
    %v636 = vmul.f32 %v539, %v142
    %v637 = vmul.f32 %v543, %v143
    %v638 = vmul.f32 %v545, %v144
    %v639 = vmul.f32 %v549, %v145
    %v640 = vmul.f32 %v551, %v146
    %v641 = vmul.f32 %v555, %v147
    %v642 = vmul.f32 %v557, %v148
    %v643 = vmul.f32 %v561, %v149
    %v644 = vmul.f32 %v563, %v150
    %v645 = vmul.f32 %v567, %v151
    %v646 = vmul.f32 %v569, %v152
    %v647 = vmul.f32 %v573, %v153
    %v648 = vmul.f32 %v575, %v154
    %v649 = vmul.f32 %v579, %v155
    %v650 = vmul.f32 %v581, %v156
    %v651 = vmul.f32 %v585, %v157
    %v652 = vmul.f32 %v587, %v158
    %v653 = vmul.f32 %v591, %v159
    %v654 = vmul.f32 %v593, %v160
    %v655 = vmul.f32 %v597, %v161
    %v656 = vmul.f32 %v599, %v162
    %v657 = vmul.f32 %v603, %v163
    %v658 = vmul.f32 %v605, %v164
    %v659 = vmul.f32 %v609, %v165
    %v660 = vmul.f32 %v611, %v166
    %v661 = vmul.f32 %v615, %v167
    %v662 = vmul.f32 %v617, %v168
    %v663 = vmul.f32 %v621, %v169
    %v664 = vmul.f32 %v623, %v170
    %v665 = vmul.f32 %v627, %v171
    %v666 = vmul.f32 %v629, %v172
    %v667 = vld [vmem:[%s4] sm:$0xff]
    %v668 = vld [vmem:[%s4 + $0x8] sm:$0xff]
    %v669 = vld [vmem:[%s4 + $0x10] sm:$0xff]
    %v670 = vld [vmem:[%s4 + $0x18] sm:$0xff]
    %v671 = vld [vmem:[%s4 + $0x20] sm:$0xff]
    %v672 = vld [vmem:[%s4 + $0x28] sm:$0xff]
    %v673 = vld [vmem:[%s4 + $0x30] sm:$0xff]
    %v674 = vld [vmem:[%s4 + $0x38] sm:$0xff]
    %v675 = vld [vmem:[%s4 + $0x40] sm:$0xff]
    %v676 = vld [vmem:[%s4 + $0x48] sm:$0xff]
    %v677 = vld [vmem:[%s4 + $0x50] sm:$0xff]
    %v678 = vld [vmem:[%s4 + $0x58] sm:$0xff]
    %v679 = vld [vmem:[%s4 + $0x60] sm:$0xff]
    %v680 = vld [vmem:[%s4 + $0x68] sm:$0xff]
    %v681 = vld [vmem:[%s4 + $0x70] sm:$0xff]
    %v682 = vld [vmem:[%s4 + $0x78] sm:$0xff]
    %v683 = vld [vmem:[%s5] sm:$0xff]
    %v684 = vld [vmem:[%s5 + $0x8] sm:$0xff]
    %v685 = vld [vmem:[%s5 + $0x10] sm:$0xff]
    %v686 = vld [vmem:[%s5 + $0x18] sm:$0xff]
    %v687 = vld [vmem:[%s5 + $0x20] sm:$0xff]
    %v688 = vld [vmem:[%s5 + $0x28] sm:$0xff]
    %v689 = vld [vmem:[%s5 + $0x30] sm:$0xff]
    %v690 = vld [vmem:[%s5 + $0x38] sm:$0xff]
    %v691 = vld [vmem:[%s5 + $0x40] sm:$0xff]
    %v692 = vld [vmem:[%s5 + $0x48] sm:$0xff]
    %v693 = vld [vmem:[%s5 + $0x50] sm:$0xff]
    %v694 = vld [vmem:[%s5 + $0x58] sm:$0xff]
    %v695 = vld [vmem:[%s5 + $0x60] sm:$0xff]
    %v696 = vld [vmem:[%s5 + $0x68] sm:$0xff]
    %v697 = vld [vmem:[%s5 + $0x70] sm:$0xff]
    %v698 = vld [vmem:[%s5 + $0x78] sm:$0xff]
    %vm699 = vcmask 130048
    %v701 = vsel %vm699, %v684, 0
    %v704 = vsel %vm699, %v686, 0
    %v707 = vsel %vm699, %v688, 0
    %v710 = vsel %vm699, %v690, 0
    %v713 = vsel %vm699, %v692, 0
    %v716 = vsel %vm699, %v694, 0
    %v719 = vsel %vm699, %v696, 0
    %v722 = vsel %vm699, %v698, 0
    %724 = vmatprep.subr.mxu0 %v632
    %725 = vmatpush1.msra.mxu0 %v631
    %726 = vmatprep.subr.mxu0 %v634
    %727 = vmatpush1.msra.mxu0 %v633
    %728 = vmatprep.subr.mxu0 %v636
    %729 = vmatpush1.msra.mxu0 %v635
    %730 = vmatprep.subr.mxu0 %v638
    %731 = vmatpush1.msra.mxu0 %v637
    %732 = vmatprep.subr.mxu0 %v640
    %733 = vmatpush1.msra.mxu0 %v639
    %734 = vmatprep.subr.mxu0 %v642
    %735 = vmatpush1.msra.mxu0 %v641
    %736 = vmatprep.subr.mxu0 %v644
    %737 = vmatpush1.msra.mxu0 %v643
    %738 = vmatprep.subr.mxu0 %v646
    %739 = vmatpush1.msra.mxu0 %v645
    %740 = vmatprep.subr.mxu0 %v648
    %741 = vmatpush1.msra.mxu0 %v647
    %742 = vmatprep.subr.mxu0 %v650
    %743 = vmatpush1.msra.mxu0 %v649
    %744 = vmatprep.subr.mxu0 %v652
    %745 = vmatpush1.msra.mxu0 %v651
    %746 = vmatprep.subr.mxu0 %v654
    %747 = vmatpush1.msra.mxu0 %v653
    %748 = vmatprep.subr.mxu0 %v656
    %749 = vmatpush1.msra.mxu0 %v655
    %750 = vmatprep.subr.mxu0 %v658
    %751 = vmatpush1.msra.mxu0 %v657
    %752 = vmatprep.subr.mxu0 %v660
    %753 = vmatpush1.msra.mxu0 %v659
    %754 = vmatprep.subr.mxu0 %v662
    %755 = vmatpush1.msra.mxu0 %v661
    %756 = vmatprep.subr.mxu0 %v664
    %757 = vmatpush1.msra.mxu0 %v663
    %758 = vmatprep.subr.mxu0 %v666
    %759 = vmatpush1.msra.mxu0 %v665
    %760 = vmatprep.subr.mxu0 0.0
    %761 = vmatpush1.msra.mxu0 0.0
    %762 = vmatprep.subr.mxu0 0.0
    %763 = vmatpush1.msra.mxu0 0.0
    %764 = vmatprep.subr.mxu0 0.0
    %765 = vmatpush1.msra.mxu0 0.0
    %766 = vmatprep.subr.mxu0 0.0
    %767 = vmatpush1.msra.mxu0 0.0
    %768 = vmatprep.subr.mxu0 0.0
    %769 = vmatpush1.msra.mxu0 0.0
    %770 = vmatprep.subr.mxu0 0.0
    %771 = vmatpush1.msra.mxu0 0.0
    %772 = vmatprep.subr.mxu0 0.0
    %773 = vmatpush1.msra.mxu0 0.0
    %774 = vmatprep.subr.mxu0 0.0
    %775 = vmatpush1.msra.mxu0 0.0
    %776 = vmatprep.subr.mxu0 0.0
    %777 = vmatpush1.msra.mxu0 0.0
    %778 = vmatprep.subr.mxu0 0.0
    %779 = vmatpush1.msra.mxu0 0.0
    %780 = vmatprep.subr.mxu0 0.0
    %781 = vmatpush1.msra.mxu0 0.0
    %782 = vmatprep.subr.mxu0 0.0
    %783 = vmatpush1.msra.mxu0 0.0
    %784 = vmatprep.subr.mxu0 0.0
    %785 = vmatpush1.msra.mxu0 0.0
    %786 = vmatprep.subr.mxu0 0.0
    %787 = vmatpush1.msra.mxu0 0.0
    %788 = vmatprep.mubr.f32.mxu0 %v701
    %789 = vmatmul.mubr.f32.gmra.mrb[0].mxu0 %v683
    %v790 = vpop.f32.mrb[0].mxu0
    %v791 = vadd.f32 0.0, %v790
    %v792 = vpop.f32.mrb[0].mxu0
    %v793 = vadd.f32 0.0, %v792
    %794 = vmatprep.mubr.f32.mxu0 %v704
    %795 = vmatmul.mubr.f32.gmra.mrb[0].mxu0 %v685
    %v796 = vpop.f32.mrb[0].mxu0
    %v797 = vadd.f32 0.0, %v796
    %v798 = vpop.f32.mrb[0].mxu0
    %v799 = vadd.f32 0.0, %v798
    %800 = vmatprep.mubr.f32.mxu0 %v707
    %801 = vmatmul.mubr.f32.gmra.mrb[0].mxu0 %v687
    %v802 = vpop.f32.mrb[0].mxu0
    %v803 = vadd.f32 0.0, %v802
    %v804 = vpop.f32.mrb[0].mxu0
    %v805 = vadd.f32 0.0, %v804
    %806 = vmatprep.mubr.f32.mxu0 %v710
    %807 = vmatmul.mubr.f32.gmra.mrb[0].mxu0 %v689
    %v808 = vpop.f32.mrb[0].mxu0
    %v809 = vadd.f32 0.0, %v808
    %v810 = vpop.f32.mrb[0].mxu0
    %v811 = vadd.f32 0.0, %v810
    %812 = vmatprep.mubr.f32.mxu0 %v713
    %813 = vmatmul.mubr.f32.gmra.mrb[0].mxu0 %v691
    %v814 = vpop.f32.mrb[0].mxu0
    %v815 = vadd.f32 0.0, %v814
    %v816 = vpop.f32.mrb[0].mxu0
    %v817 = vadd.f32 0.0, %v816
    %818 = vmatprep.mubr.f32.mxu0 %v716
    %819 = vmatmul.mubr.f32.gmra.mrb[0].mxu0 %v693
    %v820 = vpop.f32.mrb[0].mxu0
    %v821 = vadd.f32 0.0, %v820
    %v822 = vpop.f32.mrb[0].mxu0
    %v823 = vadd.f32 0.0, %v822
    %824 = vmatprep.mubr.f32.mxu0 %v719
    %825 = vmatmul.mubr.f32.gmra.mrb[0].mxu0 %v695
    %v826 = vpop.f32.mrb[0].mxu0
    %v827 = vadd.f32 0.0, %v826
    %v828 = vpop.f32.mrb[0].mxu0
    %v829 = vadd.f32 0.0, %v828
    %830 = vmatprep.mubr.f32.mxu0 %v722
    %831 = vmatmul.mubr.f32.gmra.mrb[0].mxu0 %v697
    %v832 = vpop.f32.mrb[0].mxu0
    %v833 = vadd.f32 0.0, %v832
    %v834 = vpop.f32.mrb[0].mxu0
    %v835 = vadd.f32 0.0, %v834
    %836 = vdwg.mxu0
    %v838 = vsel %vm699, %v668, 0
    %v841 = vsel %vm699, %v670, 0
    %v844 = vsel %vm699, %v672, 0
    %v847 = vsel %vm699, %v674, 0
    %v850 = vsel %vm699, %v676, 0
    %v853 = vsel %vm699, %v678, 0
    %v856 = vsel %vm699, %v680, 0
    %v859 = vsel %vm699, %v682, 0
    %861 = vmatprep.subr.mxu0 %v413
    %862 = vmatpush1.msra.mxu0 %v412
    %863 = vmatprep.subr.mxu0 %v415
    %864 = vmatpush1.msra.mxu0 %v414
    %865 = vmatprep.subr.mxu0 %v417
    %866 = vmatpush1.msra.mxu0 %v416
    %867 = vmatprep.subr.mxu0 %v419
    %868 = vmatpush1.msra.mxu0 %v418
    %869 = vmatprep.subr.mxu0 %v421
    %870 = vmatpush1.msra.mxu0 %v420
    %871 = vmatprep.subr.mxu0 %v423
    %872 = vmatpush1.msra.mxu0 %v422
    %873 = vmatprep.subr.mxu0 %v425
    %874 = vmatpush1.msra.mxu0 %v424
    %875 = vmatprep.subr.mxu0 %v427
    %876 = vmatpush1.msra.mxu0 %v426
    %877 = vmatprep.subr.mxu0 %v429
    %878 = vmatpush1.msra.mxu0 %v428
    %879 = vmatprep.subr.mxu0 %v431
    %880 = vmatpush1.msra.mxu0 %v430
    %881 = vmatprep.subr.mxu0 %v433
    %882 = vmatpush1.msra.mxu0 %v432
    %883 = vmatprep.subr.mxu0 %v435
    %884 = vmatpush1.msra.mxu0 %v434
    %885 = vmatprep.subr.mxu0 %v437
    %886 = vmatpush1.msra.mxu0 %v436
    %887 = vmatprep.subr.mxu0 %v439
    %888 = vmatpush1.msra.mxu0 %v438
    %889 = vmatprep.subr.mxu0 %v441
    %890 = vmatpush1.msra.mxu0 %v440
    %891 = vmatprep.subr.mxu0 %v443
    %892 = vmatpush1.msra.mxu0 %v442
    %893 = vmatprep.subr.mxu0 %v445
    %894 = vmatpush1.msra.mxu0 %v444
    %895 = vmatprep.subr.mxu0 %v447
    %896 = vmatpush1.msra.mxu0 %v446
    %897 = vmatprep.subr.mxu0 0.0
    %898 = vmatpush1.msra.mxu0 0.0
    %899 = vmatprep.subr.mxu0 0.0
    %900 = vmatpush1.msra.mxu0 0.0
    %901 = vmatprep.subr.mxu0 0.0
    %902 = vmatpush1.msra.mxu0 0.0
    %903 = vmatprep.subr.mxu0 0.0
    %904 = vmatpush1.msra.mxu0 0.0
    %905 = vmatprep.subr.mxu0 0.0
    %906 = vmatpush1.msra.mxu0 0.0
    %907 = vmatprep.subr.mxu0 0.0
    %908 = vmatpush1.msra.mxu0 0.0
    %909 = vmatprep.subr.mxu0 0.0
    %910 = vmatpush1.msra.mxu0 0.0
    %911 = vmatprep.subr.mxu0 0.0
    %912 = vmatpush1.msra.mxu0 0.0
    %913 = vmatprep.subr.mxu0 0.0
    %914 = vmatpush1.msra.mxu0 0.0
    %915 = vmatprep.subr.mxu0 0.0
    %916 = vmatpush1.msra.mxu0 0.0
    %917 = vmatprep.subr.mxu0 0.0
    %918 = vmatpush1.msra.mxu0 0.0
    %919 = vmatprep.subr.mxu0 0.0
    %920 = vmatpush1.msra.mxu0 0.0
    %921 = vmatprep.subr.mxu0 0.0
    %922 = vmatpush1.msra.mxu0 0.0
    %923 = vmatprep.subr.mxu0 0.0
    %924 = vmatpush1.msra.mxu0 0.0
    %925 = vmatprep.mubr.f32.mxu0 %v838
    %926 = vmatmul.mubr.f32.gmra.mrb[0].mxu0 %v667
    %v927 = vpop.f32.mrb[0].mxu0
    %v928 = vadd.f32 %v791, %v927
    %v929 = vpop.f32.mrb[0].mxu0
    %v930 = vadd.f32 %v793, %v929
    %931 = vmatprep.mubr.f32.mxu0 %v841
    %932 = vmatmul.mubr.f32.gmra.mrb[0].mxu0 %v669
    %v933 = vpop.f32.mrb[0].mxu0
    %v934 = vadd.f32 %v797, %v933
    %v935 = vpop.f32.mrb[0].mxu0
    %v936 = vadd.f32 %v799, %v935
    %937 = vmatprep.mubr.f32.mxu0 %v844
    %938 = vmatmul.mubr.f32.gmra.mrb[0].mxu0 %v671
    %v939 = vpop.f32.mrb[0].mxu0
    %v940 = vadd.f32 %v803, %v939
    %v941 = vpop.f32.mrb[0].mxu0
    %v942 = vadd.f32 %v805, %v941
    %943 = vmatprep.mubr.f32.mxu0 %v847
    %944 = vmatmul.mubr.f32.gmra.mrb[0].mxu0 %v673
    %v945 = vpop.f32.mrb[0].mxu0
    %v946 = vadd.f32 %v809, %v945
    %v947 = vpop.f32.mrb[0].mxu0
    %v948 = vadd.f32 %v811, %v947
    %949 = vmatprep.mubr.f32.mxu0 %v850
    %950 = vmatmul.mubr.f32.gmra.mrb[0].mxu0 %v675
    %v951 = vpop.f32.mrb[0].mxu0
    %v952 = vadd.f32 %v815, %v951
    %v953 = vpop.f32.mrb[0].mxu0
    %v954 = vadd.f32 %v817, %v953
    %955 = vmatprep.mubr.f32.mxu0 %v853
    %956 = vmatmul.mubr.f32.gmra.mrb[0].mxu0 %v677
    %v957 = vpop.f32.mrb[0].mxu0
    %v958 = vadd.f32 %v821, %v957
    %v959 = vpop.f32.mrb[0].mxu0
    %v960 = vadd.f32 %v823, %v959
    %961 = vmatprep.mubr.f32.mxu0 %v856
    %962 = vmatmul.mubr.f32.gmra.mrb[0].mxu0 %v679
    %v963 = vpop.f32.mrb[0].mxu0
    %v964 = vadd.f32 %v827, %v963
    %v965 = vpop.f32.mrb[0].mxu0
    %v966 = vadd.f32 %v829, %v965
    %967 = vmatprep.mubr.f32.mxu0 %v859
    %968 = vmatmul.mubr.f32.gmra.mrb[0].mxu0 %v681
    %v969 = vpop.f32.mrb[0].mxu0
    %v970 = vadd.f32 %v833, %v969
    %v971 = vpop.f32.mrb[0].mxu0
    %v972 = vadd.f32 %v835, %v971
    %973 = vdwg.mxu0
    %v974 = vld [vmem:[%s6] sm:$0xff]
    %v975 = vld [vmem:[%s6 + $0x8] sm:$0xff]
    %v976 = vld [vmem:[%s6 + $0x10] sm:$0xff]
    %v977 = vld [vmem:[%s6 + $0x18] sm:$0xff]
    %979 = vset.pattern.permute.xlu0 0
    %980 = vperm.xlu0 %979, %v974
    %v981 = vpop.permute.xlu0 %980
    %984 = vset.pattern.permute.xlu0 0
    %985 = vperm.xlu0 %984, %v975
    %v986 = vpop.permute.xlu0 %985
    %989 = vset.pattern.permute.xlu0 0
    %990 = vperm.xlu0 %989, %v976
    %v991 = vpop.permute.xlu0 %990
    %994 = vset.pattern.permute.xlu0 0
    %995 = vperm.xlu0 %994, %v977
    %v996 = vpop.permute.xlu0 %995
    %v998 = vadd.f32 %v928, %v981
    %v999 = vadd.f32 %v930, %v981
    %v1000 = vadd.f32 %v934, %v986
    %v1001 = vadd.f32 %v936, %v986
    %v1002 = vadd.f32 %v940, %v991
    %v1003 = vadd.f32 %v942, %v991
    %v1004 = vadd.f32 %v946, %v996
    %v1005 = vadd.f32 %v948, %v996
    %v1006 = vmax.f32 %v998, 0.0
    %v1007 = vmax.f32 %v999, 0.0
    %v1008 = vmax.f32 %v1000, 0.0
    %v1009 = vmax.f32 %v1001, 0.0
    %v1010 = vmax.f32 %v1002, 0.0
    %v1011 = vmax.f32 %v1003, 0.0
    %v1012 = vmax.f32 %v1004, 0.0
    %v1013 = vmax.f32 %v1005, 0.0
    %v1014 = vld [vmem:[%s7] sm:$0xff]
    %v1015 = vld [vmem:[%s7 + $0x8] sm:$0x1]
    %v1016 = vld [vmem:[%s8] sm:$0xff]
    %v1017 = vld [vmem:[%s8 + $0x8] sm:$0x1]
    %1019 = vset.pattern.permute.xlu0 0
    %1020 = vperm.xlu0 %1019, %v1016
    %v1021 = vpop.permute.xlu0 %1020
    %1024 = vset.pattern.permute.xlu0 0
    %1025 = vperm.xlu0 %1024, %v1017
    %v1026 = vpop.permute.xlu0 %1025
    %vm1028 = vcmask 261120
    %v1030 = vsel %vm1028, %v1014, 0
    %v1033 = vsel %vm1028, %v1015, 0
    %1035 = vmatprep.subr.mxu0 %v1007
    %1036 = vmatpush1.msra.mxu0 %v1006
    %1037 = vmatprep.subr.mxu0 %v1009
    %1038 = vmatpush1.msra.mxu0 %v1008
    %1039 = vmatprep.subr.mxu0 %v1011
    %1040 = vmatpush1.msra.mxu0 %v1010
    %1041 = vmatprep.subr.mxu0 %v1013
    %1042 = vmatpush1.msra.mxu0 %v1012
    %1043 = vmatprep.subr.mxu0 0.0
    %1044 = vmatpush1.msra.mxu0 0.0
    %1045 = vmatprep.subr.mxu0 0.0
    %1046 = vmatpush1.msra.mxu0 0.0
    %1047 = vmatprep.subr.mxu0 0.0
    %1048 = vmatpush1.msra.mxu0 0.0
    %1049 = vmatprep.subr.mxu0 0.0
    %1050 = vmatpush1.msra.mxu0 0.0
    %1051 = vmatprep.subr.mxu0 0.0
    %1052 = vmatpush1.msra.mxu0 0.0
    %1053 = vmatprep.subr.mxu0 0.0
    %1054 = vmatpush1.msra.mxu0 0.0
    %1055 = vmatprep.subr.mxu0 0.0
    %1056 = vmatpush1.msra.mxu0 0.0
    %1057 = vmatprep.subr.mxu0 0.0
    %1058 = vmatpush1.msra.mxu0 0.0
    %1059 = vmatprep.subr.mxu0 0.0
    %1060 = vmatpush1.msra.mxu0 0.0
    %1061 = vmatprep.subr.mxu0 0.0
    %1062 = vmatpush1.msra.mxu0 0.0
    %1063 = vmatprep.subr.mxu0 0.0
    %1064 = vmatpush1.msra.mxu0 0.0
    %1065 = vmatprep.subr.mxu0 0.0
    %1066 = vmatpush1.msra.mxu0 0.0
    %1067 = vmatprep.subr.mxu0 0.0
    %1068 = vmatpush1.msra.mxu0 0.0
    %1069 = vmatprep.subr.mxu0 0.0
    %1070 = vmatpush1.msra.mxu0 0.0
    %1071 = vmatprep.subr.mxu0 0.0
    %1072 = vmatpush1.msra.mxu0 0.0
    %1073 = vmatprep.subr.mxu0 0.0
    %1074 = vmatpush1.msra.mxu0 0.0
    %1075 = vmatprep.subr.mxu0 0.0
    %1076 = vmatpush1.msra.mxu0 0.0
    %1077 = vmatprep.subr.mxu0 0.0
    %1078 = vmatpush1.msra.mxu0 0.0
    %1079 = vmatprep.subr.mxu0 0.0
    %1080 = vmatpush1.msra.mxu0 0.0
    %1081 = vmatprep.subr.mxu0 0.0
    %1082 = vmatpush1.msra.mxu0 0.0
    %1083 = vmatprep.subr.mxu0 0.0
    %1084 = vmatpush1.msra.mxu0 0.0
    %1085 = vmatprep.subr.mxu0 0.0
    %1086 = vmatpush1.msra.mxu0 0.0
    %1087 = vmatprep.subr.mxu0 0.0
    %1088 = vmatpush1.msra.mxu0 0.0
    %1089 = vmatprep.subr.mxu0 0.0
    %1090 = vmatpush1.msra.mxu0 0.0
    %1091 = vmatprep.subr.mxu0 0.0
    %1092 = vmatpush1.msra.mxu0 0.0
    %1093 = vmatprep.subr.mxu0 0.0
    %1094 = vmatpush1.msra.mxu0 0.0
    %1095 = vmatprep.subr.mxu0 0.0
    %1096 = vmatpush1.msra.mxu0 0.0
    %1097 = vmatprep.subr.mxu0 0.0
    %1098 = vmatpush1.msra.mxu0 0.0
    %1099 = vmatprep.mubr.f32.mxu0 0.0
    %1100 = vmatmul.mubr.f32.gmra.mrb[0].mxu0 %v1030
    %v1101 = vpop.f32.mrb[0].mxu0
    %v1102 = vadd.f32 %v1021, %v1101
    %v1103 = vpop.f32.mrb[0].mxu0
    %v1104 = vadd.f32 %v1021, %v1103
    %1105 = vmatprep.mubr.f32.mxu0 0.0
    %1106 = vmatmul.mubr.f32.gmra.mrb[0].mxu0 %v1033
    %v1107 = vpop.f32.mrb[0].mxu0
    %v1108 = vadd.f32 %v1026, %v1107
    %v1109 = vpop.f32.mrb[0].mxu0
    %v1110 = vadd.f32 %v1026, %v1109
    %1111 = vdwg.mxu0
    %v1112 = vxor.u32 %v1102, 2147483648
    %v1113 = vxor.u32 %v1104, 2147483648
    %v1114 = vxor.u32 %v1108, 2147483648
    %v1115 = vxor.u32 %v1110, 2147483648
    %v1116 = vmul.f32 %v1112, 1.442695
    %v1117 = vpow.pop %v1116
    %v1118 = vmul.f32 %v1113, 1.442695
    %v1119 = vpow.pop %v1118
    %v1120 = vmul.f32 %v1114, 1.442695
    %v1121 = vpow.pop %v1120
    %v1122 = vmul.f32 %v1115, 1.442695
    %v1123 = vpow.pop %v1122
    %v1124 = vadd.f32 %v1117, 1.0
    %v1125 = vadd.f32 %v1119, 1.0
    %v1126 = vadd.f32 %v1121, 1.0
    %v1127 = vadd.f32 %v1123, 1.0
    %v1128 = vrcp.pop %v1124
    %v1129 = vmul.f32 1.0, %v1128
    %v1130 = vrcp.pop %v1125
    %v1131 = vmul.f32 1.0, %v1130
    %v1132 = vrcp.pop %v1126
    %v1133 = vmul.f32 1.0, %v1132
    %v1134 = vrcp.pop %v1127
    %v1135 = vmul.f32 1.0, %v1134
    %v1137 = vsel %vm232, %v1133, 0
    %v1140 = vsel %vm232, %v1135, 0
    %1142 = vmatprep.subr.mxu0 %v1131
    %1143 = vmatpush1.msra.mxu0 %v1129
    %1144 = vmatprep.subr.mxu0 %v1140
    %1145 = vmatpush1.msra.mxu0 %v1137
    %1146 = vmatprep.subr.mxu0 0.0
    %1147 = vmatpush1.msra.mxu0 0.0
    %1148 = vmatprep.subr.mxu0 0.0
    %1149 = vmatpush1.msra.mxu0 0.0
    %1150 = vmatprep.subr.mxu0 0.0
    %1151 = vmatpush1.msra.mxu0 0.0
    %1152 = vmatprep.subr.mxu0 0.0
    %1153 = vmatpush1.msra.mxu0 0.0
    %1154 = vmatprep.subr.mxu0 0.0
    %1155 = vmatpush1.msra.mxu0 0.0
    %1156 = vmatprep.subr.mxu0 0.0
    %1157 = vmatpush1.msra.mxu0 0.0
    %1158 = vmatprep.subr.mxu0 0.0
    %1159 = vmatpush1.msra.mxu0 0.0
    %1160 = vmatprep.subr.mxu0 0.0
    %1161 = vmatpush1.msra.mxu0 0.0
    %1162 = vmatprep.subr.mxu0 0.0
    %1163 = vmatpush1.msra.mxu0 0.0
    %1164 = vmatprep.subr.mxu0 0.0
    %1165 = vmatpush1.msra.mxu0 0.0
    %1166 = vmatprep.subr.mxu0 0.0
    %1167 = vmatpush1.msra.mxu0 0.0
    %1168 = vmatprep.subr.mxu0 0.0
    %1169 = vmatpush1.msra.mxu0 0.0
    %1170 = vmatprep.subr.mxu0 0.0
    %1171 = vmatpush1.msra.mxu0 0.0
    %1172 = vmatprep.subr.mxu0 0.0
    %1173 = vmatpush1.msra.mxu0 0.0
    %1174 = vmatprep.subr.mxu0 0.0
    %1175 = vmatpush1.msra.mxu0 0.0
    %1176 = vmatprep.subr.mxu0 0.0
    %1177 = vmatpush1.msra.mxu0 0.0
    %1178 = vmatprep.subr.mxu0 0.0
    %1179 = vmatpush1.msra.mxu0 0.0
    %1180 = vmatprep.subr.mxu0 0.0
    %1181 = vmatpush1.msra.mxu0 0.0
    %1182 = vmatprep.subr.mxu0 0.0
    %1183 = vmatpush1.msra.mxu0 0.0
    %1184 = vmatprep.subr.mxu0 0.0
    %1185 = vmatpush1.msra.mxu0 0.0
    %1186 = vmatprep.subr.mxu0 0.0
    %1187 = vmatpush1.msra.mxu0 0.0
    %1188 = vmatprep.subr.mxu0 0.0
    %1189 = vmatpush1.msra.mxu0 0.0
    %1190 = vmatprep.subr.mxu0 0.0
    %1191 = vmatpush1.msra.mxu0 0.0
    %1192 = vmatprep.subr.mxu0 0.0
    %1193 = vmatpush1.msra.mxu0 0.0
    %1194 = vmatprep.subr.mxu0 0.0
    %1195 = vmatpush1.msra.mxu0 0.0
    %1196 = vmatprep.subr.mxu0 0.0
    %1197 = vmatpush1.msra.mxu0 0.0
    %1198 = vmatprep.subr.mxu0 0.0
    %1199 = vmatpush1.msra.mxu0 0.0
    %1200 = vmatprep.subr.mxu0 0.0
    %1201 = vmatpush1.msra.mxu0 0.0
    %1202 = vmatprep.subr.mxu0 0.0
    %1203 = vmatpush1.msra.mxu0 0.0
    %1204 = vmatprep.subr.mxu0 0.0
    %1205 = vmatpush1.msra.mxu0 0.0
    %1206 = vmatprep.mubr.f32.mxu0 0.0
    %1207 = vmatmul.mubr.f32.gmra.mrb[0].mxu0 %v179
    %v1208 = vpop.f32.mrb[0].mxu0
    %v1209 = vadd.f32 0.0, %v1208
    %v1210 = vpop.f32.mrb[0].mxu0
    %v1211 = vadd.f32 0.0, %v1210
    %1212 = vmatprep.mubr.f32.mxu0 0.0
    %1213 = vmatmul.mubr.f32.gmra.mrb[0].mxu0 %v182
    %v1214 = vpop.f32.mrb[0].mxu0
    %v1215 = vadd.f32 0.0, %v1214
    %v1216 = vpop.f32.mrb[0].mxu0
    %v1217 = vadd.f32 0.0, %v1216
    %1218 = vmatprep.mubr.f32.mxu0 0.0
    %1219 = vmatmul.mubr.f32.gmra.mrb[0].mxu0 %v185
    %v1220 = vpop.f32.mrb[0].mxu0
    %v1221 = vadd.f32 0.0, %v1220
    %v1222 = vpop.f32.mrb[0].mxu0
    %v1223 = vadd.f32 0.0, %v1222
    %1224 = vmatprep.mubr.f32.mxu0 0.0
    %1225 = vmatmul.mubr.f32.gmra.mrb[0].mxu0 %v188
    %v1226 = vpop.f32.mrb[0].mxu0
    %v1227 = vadd.f32 0.0, %v1226
    %v1228 = vpop.f32.mrb[0].mxu0
    %v1229 = vadd.f32 0.0, %v1228
    %1230 = vmatprep.mubr.f32.mxu0 0.0
    %1231 = vmatmul.mubr.f32.gmra.mrb[0].mxu0 %v191
    %v1232 = vpop.f32.mrb[0].mxu0
    %v1233 = vadd.f32 0.0, %v1232
    %v1234 = vpop.f32.mrb[0].mxu0
    %v1235 = vadd.f32 0.0, %v1234
    %1236 = vmatprep.mubr.f32.mxu0 0.0
    %1237 = vmatmul.mubr.f32.gmra.mrb[0].mxu0 %v194
    %v1238 = vpop.f32.mrb[0].mxu0
    %v1239 = vadd.f32 0.0, %v1238
    %v1240 = vpop.f32.mrb[0].mxu0
    %v1241 = vadd.f32 0.0, %v1240
    %1242 = vmatprep.mubr.f32.mxu0 0.0
    %1243 = vmatmul.mubr.f32.gmra.mrb[0].mxu0 %v197
    %v1244 = vpop.f32.mrb[0].mxu0
    %v1245 = vadd.f32 0.0, %v1244
    %v1246 = vpop.f32.mrb[0].mxu0
    %v1247 = vadd.f32 0.0, %v1246
    %1248 = vmatprep.mubr.f32.mxu0 0.0
    %1249 = vmatmul.mubr.f32.gmra.mrb[0].mxu0 %v200
    %v1250 = vpop.f32.mrb[0].mxu0
    %v1251 = vadd.f32 0.0, %v1250
    %v1252 = vpop.f32.mrb[0].mxu0
    %v1253 = vadd.f32 0.0, %v1252
    %1254 = vmatprep.mubr.f32.mxu0 0.0
    %1255 = vmatmul.mubr.f32.gmra.mrb[0].mxu0 %v203
    %v1256 = vpop.f32.mrb[0].mxu0
    %v1257 = vadd.f32 0.0, %v1256
    %v1258 = vpop.f32.mrb[0].mxu0
    %v1259 = vadd.f32 0.0, %v1258
    %1260 = vmatprep.mubr.f32.mxu0 0.0
    %1261 = vmatmul.mubr.f32.gmra.mrb[0].mxu0 %v206
    %v1262 = vpop.f32.mrb[0].mxu0
    %v1263 = vadd.f32 0.0, %v1262
    %v1264 = vpop.f32.mrb[0].mxu0
    %v1265 = vadd.f32 0.0, %v1264
    %1266 = vmatprep.mubr.f32.mxu0 0.0
    %1267 = vmatmul.mubr.f32.gmra.mrb[0].mxu0 %v209
    %v1268 = vpop.f32.mrb[0].mxu0
    %v1269 = vadd.f32 0.0, %v1268
    %v1270 = vpop.f32.mrb[0].mxu0
    %v1271 = vadd.f32 0.0, %v1270
    %1272 = vmatprep.mubr.f32.mxu0 0.0
    %1273 = vmatmul.mubr.f32.gmra.mrb[0].mxu0 %v212
    %v1274 = vpop.f32.mrb[0].mxu0
    %v1275 = vadd.f32 0.0, %v1274
    %v1276 = vpop.f32.mrb[0].mxu0
    %v1277 = vadd.f32 0.0, %v1276
    %1278 = vmatprep.mubr.f32.mxu0 0.0
    %1279 = vmatmul.mubr.f32.gmra.mrb[0].mxu0 %v215
    %v1280 = vpop.f32.mrb[0].mxu0
    %v1281 = vadd.f32 0.0, %v1280
    %v1282 = vpop.f32.mrb[0].mxu0
    %v1283 = vadd.f32 0.0, %v1282
    %1284 = vmatprep.mubr.f32.mxu0 0.0
    %1285 = vmatmul.mubr.f32.gmra.mrb[0].mxu0 %v218
    %v1286 = vpop.f32.mrb[0].mxu0
    %v1287 = vadd.f32 0.0, %v1286
    %v1288 = vpop.f32.mrb[0].mxu0
    %v1289 = vadd.f32 0.0, %v1288
    %1290 = vmatprep.mubr.f32.mxu0 0.0
    %1291 = vmatmul.mubr.f32.gmra.mrb[0].mxu0 %v221
    %v1292 = vpop.f32.mrb[0].mxu0
    %v1293 = vadd.f32 0.0, %v1292
    %v1294 = vpop.f32.mrb[0].mxu0
    %v1295 = vadd.f32 0.0, %v1294
    %1296 = vmatprep.mubr.f32.mxu0 0.0
    %1297 = vmatmul.mubr.f32.gmra.mrb[0].mxu0 %v224
    %v1298 = vpop.f32.mrb[0].mxu0
    %v1299 = vadd.f32 0.0, %v1298
    %v1300 = vpop.f32.mrb[0].mxu0
    %v1301 = vadd.f32 0.0, %v1300
    %1302 = vmatprep.mubr.f32.mxu0 0.0
    %1303 = vmatmul.mubr.f32.gmra.mrb[0].mxu0 %v227
    %v1304 = vpop.f32.mrb[0].mxu0
    %v1305 = vadd.f32 0.0, %v1304
    %v1306 = vpop.f32.mrb[0].mxu0
    %v1307 = vadd.f32 0.0, %v1306
    %1308 = vmatprep.mubr.f32.mxu0 0.0
    %1309 = vmatmul.mubr.f32.gmra.mrb[0].mxu0 %v230
    %v1310 = vpop.f32.mrb[0].mxu0
    %v1311 = vadd.f32 0.0, %v1310
    %v1312 = vpop.f32.mrb[0].mxu0
    %v1313 = vadd.f32 0.0, %v1312
    %1314 = vdwg.mxu0
    %v1315 = vld [vmem:[#allocation8] sm:$0xff]
    %v1316 = vld [vmem:[#allocation8 + $0x8] sm:$0xff]
    %v1317 = vld [vmem:[#allocation8 + $0x10] sm:$0xff]
    %v1318 = vld [vmem:[#allocation8 + $0x18] sm:$0xff]
    %v1319 = vld [vmem:[#allocation8 + $0x20] sm:$0xff]
    %v1320 = vld [vmem:[#allocation8 + $0x28] sm:$0xff]
    %v1321 = vld [vmem:[#allocation8 + $0x30] sm:$0xff]
    %v1322 = vld [vmem:[#allocation8 + $0x38] sm:$0xff]
    %v1323 = vmul.f32 %v412, %v1209
    %v1324 = vmul.f32 %v413, %v1211
    %v1325 = vmul.f32 %v414, %v1215
    %v1326 = vmul.f32 %v415, %v1217
    %v1327 = vmul.f32 %v416, %v1221
    %v1328 = vmul.f32 %v417, %v1223
    %v1329 = vmul.f32 %v418, %v1227
    %v1330 = vmul.f32 %v419, %v1229
    %v1331 = vmul.f32 %v420, %v1233
    %v1332 = vmul.f32 %v421, %v1235
    %v1333 = vmul.f32 %v422, %v1239
    %v1334 = vmul.f32 %v423, %v1241
    %v1335 = vmul.f32 %v424, %v1245
    %v1336 = vmul.f32 %v425, %v1247
    %v1337 = vmul.f32 %v426, %v1251
    %v1338 = vmul.f32 %v427, %v1253
    %v1339 = vmul.f32 %v428, %v1257
    %v1340 = vmul.f32 %v429, %v1259
    %v1341 = vmul.f32 %v430, %v1263
    %v1342 = vmul.f32 %v431, %v1265
    %v1343 = vmul.f32 %v432, %v1269
    %v1344 = vmul.f32 %v433, %v1271
    %v1345 = vmul.f32 %v434, %v1275
    %v1346 = vmul.f32 %v435, %v1277
    %v1347 = vmul.f32 %v436, %v1281
    %v1348 = vmul.f32 %v437, %v1283
    %v1349 = vmul.f32 %v438, %v1287
    %v1350 = vmul.f32 %v439, %v1289
    %v1351 = vmul.f32 %v440, %v1293
    %v1352 = vmul.f32 %v441, %v1295
    %v1353 = vmul.f32 %v442, %v1299
    %v1354 = vmul.f32 %v443, %v1301
    %v1355 = vmul.f32 %v444, %v1305
    %v1356 = vmul.f32 %v445, %v1307
    %v1357 = vmul.f32 %v446, %v1311
    %v1358 = vmul.f32 %v447, %v1313
    %v1359 = vld [vmem:[#allocation10] sm:$0xff]
    %v1360 = vld [vmem:[#allocation10 + $0x8] sm:$0xff]
    %v1361 = vld [vmem:[#allocation10 + $0x10] sm:$0xff]
    %v1362 = vld [vmem:[#allocation10 + $0x18] sm:$0xff]
    %v1363 = vld [vmem:[#allocation10 + $0x20] sm:$0xff]
    %v1364 = vld [vmem:[#allocation10 + $0x28] sm:$0xff]
    %v1365 = vld [vmem:[#allocation10 + $0x30] sm:$0xff]
    %v1366 = vld [vmem:[#allocation10 + $0x38] sm:$0xff]
    %v1367 = vmul.f32 %v631, %v1209
    %v1368 = vmul.f32 %v632, %v1211
    %v1369 = vmul.f32 %v633, %v1215
    %v1370 = vmul.f32 %v634, %v1217
    %v1371 = vmul.f32 %v635, %v1221
    %v1372 = vmul.f32 %v636, %v1223
    %v1373 = vmul.f32 %v637, %v1227
    %v1374 = vmul.f32 %v638, %v1229
    %v1375 = vmul.f32 %v639, %v1233
    %v1376 = vmul.f32 %v640, %v1235
    %v1377 = vmul.f32 %v641, %v1239
    %v1378 = vmul.f32 %v642, %v1241
    %v1379 = vmul.f32 %v643, %v1245
    %v1380 = vmul.f32 %v644, %v1247
    %v1381 = vmul.f32 %v645, %v1251
    %v1382 = vmul.f32 %v646, %v1253
    %v1383 = vmul.f32 %v647, %v1257
    %v1384 = vmul.f32 %v648, %v1259
    %v1385 = vmul.f32 %v649, %v1263
    %v1386 = vmul.f32 %v650, %v1265
    %v1387 = vmul.f32 %v651, %v1269
    %v1388 = vmul.f32 %v652, %v1271
    %v1389 = vmul.f32 %v653, %v1275
    %v1390 = vmul.f32 %v654, %v1277
    %v1391 = vmul.f32 %v655, %v1281
    %v1392 = vmul.f32 %v656, %v1283
    %v1393 = vmul.f32 %v657, %v1287
    %v1394 = vmul.f32 %v658, %v1289
    %v1395 = vmul.f32 %v659, %v1293
    %v1396 = vmul.f32 %v660, %v1295
    %v1397 = vmul.f32 %v661, %v1299
    %v1398 = vmul.f32 %v662, %v1301
    %v1399 = vmul.f32 %v663, %v1305
    %v1400 = vmul.f32 %v664, %v1307
    %v1401 = vmul.f32 %v665, %v1311
    %v1402 = vmul.f32 %v666, %v1313
    %v1404 = vsel %vm699, %v1360, 0
    %v1407 = vsel %vm699, %v1362, 0
    %v1410 = vsel %vm699, %v1364, 0
    %v1413 = vsel %vm699, %v1366, 0
    %1415 = vmatprep.subr.mxu0 %v1368
    %1416 = vmatpush1.msra.mxu0 %v1367
    %1417 = vmatprep.subr.mxu0 %v1370
    %1418 = vmatpush1.msra.mxu0 %v1369
    %1419 = vmatprep.subr.mxu0 %v1372
    %1420 = vmatpush1.msra.mxu0 %v1371
    %1421 = vmatprep.subr.mxu0 %v1374
    %1422 = vmatpush1.msra.mxu0 %v1373
    %1423 = vmatprep.subr.mxu0 %v1376
    %1424 = vmatpush1.msra.mxu0 %v1375
    %1425 = vmatprep.subr.mxu0 %v1378
    %1426 = vmatpush1.msra.mxu0 %v1377
    %1427 = vmatprep.subr.mxu0 %v1380
    %1428 = vmatpush1.msra.mxu0 %v1379
    %1429 = vmatprep.subr.mxu0 %v1382
    %1430 = vmatpush1.msra.mxu0 %v1381
    %1431 = vmatprep.subr.mxu0 %v1384
    %1432 = vmatpush1.msra.mxu0 %v1383
    %1433 = vmatprep.subr.mxu0 %v1386
    %1434 = vmatpush1.msra.mxu0 %v1385
    %1435 = vmatprep.subr.mxu0 %v1388
    %1436 = vmatpush1.msra.mxu0 %v1387
    %1437 = vmatprep.subr.mxu0 %v1390
    %1438 = vmatpush1.msra.mxu0 %v1389
    %1439 = vmatprep.subr.mxu0 %v1392
    %1440 = vmatpush1.msra.mxu0 %v1391
    %1441 = vmatprep.subr.mxu0 %v1394
    %1442 = vmatpush1.msra.mxu0 %v1393
    %1443 = vmatprep.subr.mxu0 %v1396
    %1444 = vmatpush1.msra.mxu0 %v1395
    %1445 = vmatprep.subr.mxu0 %v1398
    %1446 = vmatpush1.msra.mxu0 %v1397
    %1447 = vmatprep.subr.mxu0 %v1400
    %1448 = vmatpush1.msra.mxu0 %v1399
    %1449 = vmatprep.subr.mxu0 %v1402
    %1450 = vmatpush1.msra.mxu0 %v1401
    %1451 = vmatprep.subr.mxu0 0.0
    %1452 = vmatpush1.msra.mxu0 0.0
    %1453 = vmatprep.subr.mxu0 0.0
    %1454 = vmatpush1.msra.mxu0 0.0
    %1455 = vmatprep.subr.mxu0 0.0
    %1456 = vmatpush1.msra.mxu0 0.0
    %1457 = vmatprep.subr.mxu0 0.0
    %1458 = vmatpush1.msra.mxu0 0.0
    %1459 = vmatprep.subr.mxu0 0.0
    %1460 = vmatpush1.msra.mxu0 0.0
    %1461 = vmatprep.subr.mxu0 0.0
    %1462 = vmatpush1.msra.mxu0 0.0
    %1463 = vmatprep.subr.mxu0 0.0
    %1464 = vmatpush1.msra.mxu0 0.0
    %1465 = vmatprep.subr.mxu0 0.0
    %1466 = vmatpush1.msra.mxu0 0.0
    %1467 = vmatprep.subr.mxu0 0.0
    %1468 = vmatpush1.msra.mxu0 0.0
    %1469 = vmatprep.subr.mxu0 0.0
    %1470 = vmatpush1.msra.mxu0 0.0
    %1471 = vmatprep.subr.mxu0 0.0
    %1472 = vmatpush1.msra.mxu0 0.0
    %1473 = vmatprep.subr.mxu0 0.0
    %1474 = vmatpush1.msra.mxu0 0.0
    %1475 = vmatprep.subr.mxu0 0.0
    %1476 = vmatpush1.msra.mxu0 0.0
    %1477 = vmatprep.subr.mxu0 0.0
    %1478 = vmatpush1.msra.mxu0 0.0
    %1479 = vmatprep.mubr.f32.mxu0 %v1404
    %1480 = vmatmul.mubr.f32.gmra.mrb[0].mxu0 %v1359
    %v1481 = vpop.f32.mrb[0].mxu0
    %v1482 = vadd.f32 0.0, %v1481
    %v1483 = vpop.f32.mrb[0].mxu0
    %v1484 = vadd.f32 0.0, %v1483
    %1485 = vmatprep.mubr.f32.mxu0 %v1407
    %1486 = vmatmul.mubr.f32.gmra.mrb[0].mxu0 %v1361
    %v1487 = vpop.f32.mrb[0].mxu0
    %v1488 = vadd.f32 0.0, %v1487
    %v1489 = vpop.f32.mrb[0].mxu0
    %v1490 = vadd.f32 0.0, %v1489
    %1491 = vmatprep.mubr.f32.mxu0 %v1410
    %1492 = vmatmul.mubr.f32.gmra.mrb[0].mxu0 %v1363
    %v1493 = vpop.f32.mrb[0].mxu0
    %v1494 = vadd.f32 0.0, %v1493
    %v1495 = vpop.f32.mrb[0].mxu0
    %v1496 = vadd.f32 0.0, %v1495
    %1497 = vmatprep.mubr.f32.mxu0 %v1413
    %1498 = vmatmul.mubr.f32.gmra.mrb[0].mxu0 %v1365
    %v1499 = vpop.f32.mrb[0].mxu0
    %v1500 = vadd.f32 0.0, %v1499
    %v1501 = vpop.f32.mrb[0].mxu0
    %v1502 = vadd.f32 0.0, %v1501
    %1503 = vdwg.mxu0
    %v1505 = vsel %vm699, %v1316, 0
    %v1508 = vsel %vm699, %v1318, 0
    %v1511 = vsel %vm699, %v1320, 0
    %v1514 = vsel %vm699, %v1322, 0
    %1516 = vmatprep.subr.mxu0 %v1324
    %1517 = vmatpush1.msra.mxu0 %v1323
    %1518 = vmatprep.subr.mxu0 %v1326
    %1519 = vmatpush1.msra.mxu0 %v1325
    %1520 = vmatprep.subr.mxu0 %v1328
    %1521 = vmatpush1.msra.mxu0 %v1327
    %1522 = vmatprep.subr.mxu0 %v1330
    %1523 = vmatpush1.msra.mxu0 %v1329
    %1524 = vmatprep.subr.mxu0 %v1332
    %1525 = vmatpush1.msra.mxu0 %v1331
    %1526 = vmatprep.subr.mxu0 %v1334
    %1527 = vmatpush1.msra.mxu0 %v1333
    %1528 = vmatprep.subr.mxu0 %v1336
    %1529 = vmatpush1.msra.mxu0 %v1335
    %1530 = vmatprep.subr.mxu0 %v1338
    %1531 = vmatpush1.msra.mxu0 %v1337
    %1532 = vmatprep.subr.mxu0 %v1340
    %1533 = vmatpush1.msra.mxu0 %v1339
    %1534 = vmatprep.subr.mxu0 %v1342
    %1535 = vmatpush1.msra.mxu0 %v1341
    %1536 = vmatprep.subr.mxu0 %v1344
    %1537 = vmatpush1.msra.mxu0 %v1343
    %1538 = vmatprep.subr.mxu0 %v1346
    %1539 = vmatpush1.msra.mxu0 %v1345
    %1540 = vmatprep.subr.mxu0 %v1348
    %1541 = vmatpush1.msra.mxu0 %v1347
    %1542 = vmatprep.subr.mxu0 %v1350
    %1543 = vmatpush1.msra.mxu0 %v1349
    %1544 = vmatprep.subr.mxu0 %v1352
    %1545 = vmatpush1.msra.mxu0 %v1351
    %1546 = vmatprep.subr.mxu0 %v1354
    %1547 = vmatpush1.msra.mxu0 %v1353
    %1548 = vmatprep.subr.mxu0 %v1356
    %1549 = vmatpush1.msra.mxu0 %v1355
    %1550 = vmatprep.subr.mxu0 %v1358
    %1551 = vmatpush1.msra.mxu0 %v1357
    %1552 = vmatprep.subr.mxu0 0.0
    %1553 = vmatpush1.msra.mxu0 0.0
    %1554 = vmatprep.subr.mxu0 0.0
    %1555 = vmatpush1.msra.mxu0 0.0
    %1556 = vmatprep.subr.mxu0 0.0
    %1557 = vmatpush1.msra.mxu0 0.0
    %1558 = vmatprep.subr.mxu0 0.0
    %1559 = vmatpush1.msra.mxu0 0.0
    %1560 = vmatprep.subr.mxu0 0.0
    %1561 = vmatpush1.msra.mxu0 0.0
    %1562 = vmatprep.subr.mxu0 0.0
    %1563 = vmatpush1.msra.mxu0 0.0
    %1564 = vmatprep.subr.mxu0 0.0
    %1565 = vmatpush1.msra.mxu0 0.0
    %1566 = vmatprep.subr.mxu0 0.0
    %1567 = vmatpush1.msra.mxu0 0.0
    %1568 = vmatprep.subr.mxu0 0.0
    %1569 = vmatpush1.msra.mxu0 0.0
    %1570 = vmatprep.subr.mxu0 0.0
    %1571 = vmatpush1.msra.mxu0 0.0
    %1572 = vmatprep.subr.mxu0 0.0
    %1573 = vmatpush1.msra.mxu0 0.0
    %1574 = vmatprep.subr.mxu0 0.0
    %1575 = vmatpush1.msra.mxu0 0.0
    %1576 = vmatprep.subr.mxu0 0.0
    %1577 = vmatpush1.msra.mxu0 0.0
    %1578 = vmatprep.subr.mxu0 0.0
    %1579 = vmatpush1.msra.mxu0 0.0
    %1580 = vmatprep.mubr.f32.mxu0 %v1505
    %1581 = vmatmul.mubr.f32.gmra.mrb[0].mxu0 %v1315
    %v1582 = vpop.f32.mrb[0].mxu0
    %v1583 = vadd.f32 %v1482, %v1582
    %v1584 = vpop.f32.mrb[0].mxu0
    %v1585 = vadd.f32 %v1484, %v1584
    %1586 = vmatprep.mubr.f32.mxu0 %v1508
    %1587 = vmatmul.mubr.f32.gmra.mrb[0].mxu0 %v1317
    %v1588 = vpop.f32.mrb[0].mxu0
    %v1589 = vadd.f32 %v1488, %v1588
    %v1590 = vpop.f32.mrb[0].mxu0
    %v1591 = vadd.f32 %v1490, %v1590
    %1592 = vmatprep.mubr.f32.mxu0 %v1511
    %1593 = vmatmul.mubr.f32.gmra.mrb[0].mxu0 %v1319
    %v1594 = vpop.f32.mrb[0].mxu0
    %v1595 = vadd.f32 %v1494, %v1594
    %v1596 = vpop.f32.mrb[0].mxu0
    %v1597 = vadd.f32 %v1496, %v1596
    %1598 = vmatprep.mubr.f32.mxu0 %v1514
    %1599 = vmatmul.mubr.f32.gmra.mrb[0].mxu0 %v1321
    %v1600 = vpop.f32.mrb[0].mxu0
    %v1601 = vadd.f32 %v1500, %v1600
    %v1602 = vpop.f32.mrb[0].mxu0
    %v1603 = vadd.f32 %v1502, %v1602
    %1604 = vdwg.mxu0
    %v1605 = vsub.f32 %v952, %v1583
    %v1606 = vsub.f32 %v954, %v1585
    %v1607 = vsub.f32 %v958, %v1589
    %v1608 = vsub.f32 %v960, %v1591
    %v1609 = vsub.f32 %v964, %v1595
    %v1610 = vsub.f32 %v966, %v1597
    %v1611 = vsub.f32 %v970, %v1601
    %v1612 = vsub.f32 %v972, %v1603
    %v1613 = vld [vmem:[%s11] sm:$0xff]
    %v1614 = vld [vmem:[%s11 + $0x8] sm:$0xff]
    %v1615 = vld [vmem:[%s11 + $0x10] sm:$0xff]
    %v1616 = vld [vmem:[%s11 + $0x18] sm:$0xff]
    %1618 = vset.pattern.permute.xlu0 0
    %1619 = vperm.xlu0 %1618, %v1613
    %v1620 = vpop.permute.xlu0 %1619
    %1623 = vset.pattern.permute.xlu0 0
    %1624 = vperm.xlu0 %1623, %v1614
    %v1625 = vpop.permute.xlu0 %1624
    %1628 = vset.pattern.permute.xlu0 0
    %1629 = vperm.xlu0 %1628, %v1615
    %v1630 = vpop.permute.xlu0 %1629
    %1633 = vset.pattern.permute.xlu0 0
    %1634 = vperm.xlu0 %1633, %v1616
    %v1635 = vpop.permute.xlu0 %1634
    %v1637 = vadd.f32 %v1583, %v1620
    %v1638 = vadd.f32 %v1585, %v1620
    %v1639 = vadd.f32 %v1589, %v1625
    %v1640 = vadd.f32 %v1591, %v1625
    %v1641 = vadd.f32 %v1595, %v1630
    %v1642 = vadd.f32 %v1597, %v1630
    %v1643 = vadd.f32 %v1601, %v1635
    %v1644 = vadd.f32 %v1603, %v1635
    %v1645 = vmax.f32 %v1637, 0.0
    %v1646 = vmax.f32 %v1638, 0.0
    %v1647 = vmax.f32 %v1639, 0.0
    %v1648 = vmax.f32 %v1640, 0.0
    %v1649 = vmax.f32 %v1641, 0.0
    %v1650 = vmax.f32 %v1642, 0.0
    %v1651 = vmax.f32 %v1643, 0.0
    %v1652 = vmax.f32 %v1644, 0.0
    %v1653 = vadd.f32 %v1605, %v1620
    %v1654 = vadd.f32 %v1606, %v1620
    %v1655 = vadd.f32 %v1607, %v1625
    %v1656 = vadd.f32 %v1608, %v1625
    %v1657 = vadd.f32 %v1609, %v1630
    %v1658 = vadd.f32 %v1610, %v1630
    %v1659 = vadd.f32 %v1611, %v1635
    %v1660 = vadd.f32 %v1612, %v1635
    %v1661 = vmax.f32 %v1653, 0.0
    %v1662 = vmax.f32 %v1654, 0.0
    %v1663 = vmax.f32 %v1655, 0.0
    %v1664 = vmax.f32 %v1656, 0.0
    %v1665 = vmax.f32 %v1657, 0.0
    %v1666 = vmax.f32 %v1658, 0.0
    %v1667 = vmax.f32 %v1659, 0.0
    %v1668 = vmax.f32 %v1660, 0.0
    %v1669 = vld [vmem:[%s12] sm:$0xff]
    %v1670 = vld [vmem:[%s12 + $0x8] sm:$0xff]
    %v1671 = vld [vmem:[%s13] sm:$0xff]
    %v1672 = vld [vmem:[%s13 + $0x8] sm:$0xff]
    %1674 = vset.pattern.permute.xlu0 0
    %1675 = vperm.xlu0 %1674, %v1671
    %v1676 = vpop.permute.xlu0 %1675
    %1679 = vset.pattern.permute.xlu0 0
    %1680 = vperm.xlu0 %1679, %v1672
    %v1681 = vpop.permute.xlu0 %1680
    %v1684 = vsel %vm1028, %v1669, 0
    %v1687 = vsel %vm1028, %v1670, 0
    %1689 = vmatprep.subr.mxu0 %v1646
    %1690 = vmatpush1.msra.mxu0 %v1645
    %1691 = vmatprep.subr.mxu0 %v1648
    %1692 = vmatpush1.msra.mxu0 %v1647
    %1693 = vmatprep.subr.mxu0 %v1650
    %1694 = vmatpush1.msra.mxu0 %v1649
    %1695 = vmatprep.subr.mxu0 %v1652
    %1696 = vmatpush1.msra.mxu0 %v1651
    %1697 = vmatprep.subr.mxu0 0.0
    %1698 = vmatpush1.msra.mxu0 0.0
    %1699 = vmatprep.subr.mxu0 0.0
    %1700 = vmatpush1.msra.mxu0 0.0
    %1701 = vmatprep.subr.mxu0 0.0
    %1702 = vmatpush1.msra.mxu0 0.0
    %1703 = vmatprep.subr.mxu0 0.0
    %1704 = vmatpush1.msra.mxu0 0.0
    %1705 = vmatprep.subr.mxu0 0.0
    %1706 = vmatpush1.msra.mxu0 0.0
    %1707 = vmatprep.subr.mxu0 0.0
    %1708 = vmatpush1.msra.mxu0 0.0
    %1709 = vmatprep.subr.mxu0 0.0
    %1710 = vmatpush1.msra.mxu0 0.0
    %1711 = vmatprep.subr.mxu0 0.0
    %1712 = vmatpush1.msra.mxu0 0.0
    %1713 = vmatprep.subr.mxu0 0.0
    %1714 = vmatpush1.msra.mxu0 0.0
    %1715 = vmatprep.subr.mxu0 0.0
    %1716 = vmatpush1.msra.mxu0 0.0
    %1717 = vmatprep.subr.mxu0 0.0
    %1718 = vmatpush1.msra.mxu0 0.0
    %1719 = vmatprep.subr.mxu0 0.0
    %1720 = vmatpush1.msra.mxu0 0.0
    %1721 = vmatprep.subr.mxu0 0.0
    %1722 = vmatpush1.msra.mxu0 0.0
    %1723 = vmatprep.subr.mxu0 0.0
    %1724 = vmatpush1.msra.mxu0 0.0
    %1725 = vmatprep.subr.mxu0 0.0
    %1726 = vmatpush1.msra.mxu0 0.0
    %1727 = vmatprep.subr.mxu0 0.0
    %1728 = vmatpush1.msra.mxu0 0.0
    %1729 = vmatprep.subr.mxu0 0.0
    %1730 = vmatpush1.msra.mxu0 0.0
    %1731 = vmatprep.subr.mxu0 0.0
    %1732 = vmatpush1.msra.mxu0 0.0
    %1733 = vmatprep.subr.mxu0 0.0
    %1734 = vmatpush1.msra.mxu0 0.0
    %1735 = vmatprep.subr.mxu0 0.0
    %1736 = vmatpush1.msra.mxu0 0.0
    %1737 = vmatprep.subr.mxu0 0.0
    %1738 = vmatpush1.msra.mxu0 0.0
    %1739 = vmatprep.subr.mxu0 0.0
    %1740 = vmatpush1.msra.mxu0 0.0
    %1741 = vmatprep.subr.mxu0 0.0
    %1742 = vmatpush1.msra.mxu0 0.0
    %1743 = vmatprep.subr.mxu0 0.0
    %1744 = vmatpush1.msra.mxu0 0.0
    %1745 = vmatprep.subr.mxu0 0.0
    %1746 = vmatpush1.msra.mxu0 0.0
    %1747 = vmatprep.subr.mxu0 0.0
    %1748 = vmatpush1.msra.mxu0 0.0
    %1749 = vmatprep.subr.mxu0 0.0
    %1750 = vmatpush1.msra.mxu0 0.0
    %1751 = vmatprep.subr.mxu0 0.0
    %1752 = vmatpush1.msra.mxu0 0.0
    %1753 = vmatprep.mubr.f32.mxu0 0.0
    %1754 = vmatmul.mubr.f32.gmra.mrb[0].mxu0 %v1684
    %v1755 = vpop.f32.mrb[0].mxu0
    %v1756 = vadd.f32 %v1676, %v1755
    %v1757 = vpop.f32.mrb[0].mxu0
    %v1758 = vadd.f32 %v1676, %v1757
    %1759 = vmatprep.mubr.f32.mxu0 0.0
    %1760 = vmatmul.mubr.f32.gmra.mrb[0].mxu0 %v1687
    %v1761 = vpop.f32.mrb[0].mxu0
    %v1762 = vadd.f32 %v1681, %v1761
    %v1763 = vpop.f32.mrb[0].mxu0
    %v1764 = vadd.f32 %v1681, %v1763
    %1765 = vdwg.mxu0
    %1766 = vst [vmem:[#allocation11] sm:$0xff] %v1756
    %1767 = vst [vmem:[#allocation11 + $0x8] sm:$0xff] %v1758
    %1768 = vst [vmem:[#allocation11 + $0x10] sm:$0xff] %v1762
    %1769 = vst [vmem:[#allocation11 + $0x18] sm:$0xff] %v1764
    %1770 = vmatprep.subr.mxu0 %v1662
    %1771 = vmatpush1.msra.mxu0 %v1661
    %1772 = vmatprep.subr.mxu0 %v1664
    %1773 = vmatpush1.msra.mxu0 %v1663
    %1774 = vmatprep.subr.mxu0 %v1666
    %1775 = vmatpush1.msra.mxu0 %v1665
    %1776 = vmatprep.subr.mxu0 %v1668
    %1777 = vmatpush1.msra.mxu0 %v1667
    %1778 = vmatprep.subr.mxu0 0.0
    %1779 = vmatpush1.msra.mxu0 0.0
    %1780 = vmatprep.subr.mxu0 0.0
    %1781 = vmatpush1.msra.mxu0 0.0
    %1782 = vmatprep.subr.mxu0 0.0
    %1783 = vmatpush1.msra.mxu0 0.0
    %1784 = vmatprep.subr.mxu0 0.0
    %1785 = vmatpush1.msra.mxu0 0.0
    %1786 = vmatprep.subr.mxu0 0.0
    %1787 = vmatpush1.msra.mxu0 0.0
    %1788 = vmatprep.subr.mxu0 0.0
    %1789 = vmatpush1.msra.mxu0 0.0
    %1790 = vmatprep.subr.mxu0 0.0
    %1791 = vmatpush1.msra.mxu0 0.0
    %1792 = vmatprep.subr.mxu0 0.0
    %1793 = vmatpush1.msra.mxu0 0.0
    %1794 = vmatprep.subr.mxu0 0.0
    %1795 = vmatpush1.msra.mxu0 0.0
    %1796 = vmatprep.subr.mxu0 0.0
    %1797 = vmatpush1.msra.mxu0 0.0
    %1798 = vmatprep.subr.mxu0 0.0
    %1799 = vmatpush1.msra.mxu0 0.0
    %1800 = vmatprep.subr.mxu0 0.0
    %1801 = vmatpush1.msra.mxu0 0.0
    %1802 = vmatprep.subr.mxu0 0.0
    %1803 = vmatpush1.msra.mxu0 0.0
    %1804 = vmatprep.subr.mxu0 0.0
    %1805 = vmatpush1.msra.mxu0 0.0
    %1806 = vmatprep.subr.mxu0 0.0
    %1807 = vmatpush1.msra.mxu0 0.0
    %1808 = vmatprep.subr.mxu0 0.0
    %1809 = vmatpush1.msra.mxu0 0.0
    %1810 = vmatprep.subr.mxu0 0.0
    %1811 = vmatpush1.msra.mxu0 0.0
    %1812 = vmatprep.subr.mxu0 0.0
    %1813 = vmatpush1.msra.mxu0 0.0
    %1814 = vmatprep.subr.mxu0 0.0
    %1815 = vmatpush1.msra.mxu0 0.0
    %1816 = vmatprep.subr.mxu0 0.0
    %1817 = vmatpush1.msra.mxu0 0.0
    %1818 = vmatprep.subr.mxu0 0.0
    %1819 = vmatpush1.msra.mxu0 0.0
    %1820 = vmatprep.subr.mxu0 0.0
    %1821 = vmatpush1.msra.mxu0 0.0
    %1822 = vmatprep.subr.mxu0 0.0
    %1823 = vmatpush1.msra.mxu0 0.0
    %1824 = vmatprep.subr.mxu0 0.0
    %1825 = vmatpush1.msra.mxu0 0.0
    %1826 = vmatprep.subr.mxu0 0.0
    %1827 = vmatpush1.msra.mxu0 0.0
    %1828 = vmatprep.subr.mxu0 0.0
    %1829 = vmatpush1.msra.mxu0 0.0
    %1830 = vmatprep.subr.mxu0 0.0
    %1831 = vmatpush1.msra.mxu0 0.0
    %1832 = vmatprep.subr.mxu0 0.0
    %1833 = vmatpush1.msra.mxu0 0.0
    %1834 = vmatprep.mubr.f32.mxu0 0.0
    %1835 = vmatmul.mubr.f32.gmra.mrb[0].mxu0 %v1684
    %v1836 = vpop.f32.mrb[0].mxu0
    %v1837 = vadd.f32 %v1676, %v1836
    %v1838 = vpop.f32.mrb[0].mxu0
    %v1839 = vadd.f32 %v1676, %v1838
    %1840 = vmatprep.mubr.f32.mxu0 0.0
    %1841 = vmatmul.mubr.f32.gmra.mrb[0].mxu0 %v1687
    %v1842 = vpop.f32.mrb[0].mxu0
    %v1843 = vadd.f32 %v1681, %v1842
    %v1844 = vpop.f32.mrb[0].mxu0
    %v1845 = vadd.f32 %v1681, %v1844
    %1846 = vdwg.mxu0
    %1847 = vst [vmem:[#allocation12] sm:$0xff] %v1837
    %1848 = vst [vmem:[#allocation12 + $0x8] sm:$0xff] %v1839
    %1849 = vst [vmem:[#allocation12 + $0x10] sm:$0xff] %v1843
    %1850 = vst [vmem:[#allocation12 + $0x18] sm:$0xff] %v1845
    // Predicated region
    $region78: #{tpu_custom_call.1} parent=1 // pred_check
      _
    $region79: #{tpu_custom_call.1} parent=1 // pred_check_branch
      %1852 = sbr.rel (0) target = $region81
    $region80: #{tpu_custom_call.1} parent=1 // pred_region
      %s1854 = ssub.s32 512, 512
      %1855 = vsyncadd [#allocation4], %s1854
      %s1856 = sshll.u32 [#allocation11], 4
      %s1857 = int_to_ptr.vmem [resolvable:$true] %s1856
      %1862 = dma.vmem_to_hbm [thread:$0]  %s1857, 512, %s14, [#allocation4], 256, 256, 16
    $region81: #{tpu_custom_call.1} parent=1 // pred_fallthru
      _
    // Predicated region
    $region82: #{tpu_custom_call.1} parent=1 // pred_check
      _
    $region83: #{tpu_custom_call.1} parent=1 // pred_check_branch
      %1864 = sbr.rel (0) target = $region85
    $region84: #{tpu_custom_call.1} parent=1 // pred_region
      %s1866 = ssub.s32 512, 512
      %1867 = vsyncadd [#allocation13], %s1866
      %s1868 = sshll.u32 [#allocation12], 4
      %s1869 = int_to_ptr.vmem [resolvable:$true] %s1868
      %1874 = dma.vmem_to_hbm [thread:$0]  %s1869, 512, %s15, [#allocation13], 256, 256, 16
    $region85: #{tpu_custom_call.1} parent=1 // pred_fallthru
      _
    // Predicated region
    $region86: #{tpu_custom_call.1} parent=1 // pred_check
      _
    $region87: #{tpu_custom_call.1} parent=1 // pred_check_branch
      %1876 = sbr.rel (0) target = $region89
    $region88: #{tpu_custom_call.1} parent=1 // pred_region
      %1877 = dma.done [#allocation4], 512
    $region89: #{tpu_custom_call.1} parent=1 // pred_fallthru
      _
    // Predicated region
    $region90: #{tpu_custom_call.1} parent=1 // pred_check
      _
    $region91: #{tpu_custom_call.1} parent=1 // pred_check_branch
      %1879 = sbr.rel (0) target = $region93
    $region92: #{tpu_custom_call.1} parent=1 // pred_region
      %1880 = dma.done [#allocation13], 512
    $region93: #{tpu_custom_call.1} parent=1 // pred_fallthru
      _
    %1881 = vsyncpa [#allocation3], 1
    %1882 = vsyncpa [#allocation6], 1
    %1883 = vsyncpa [#allocation9], 1
    %1884 = vsyncpa [#allocation4], 1
    %1885 = vsyncpa [#allocation13], 1

</llo_original>
